<compile_context>
chip_gen: v5e
topology: v5e:2x2
jax: 0.10.0
libtpu: 0.0.40
codegen_flags: <defaults>
</compile_context>

<pallas_src>
import functools

import jax
import jax.numpy as jnp
import numpy as np
from jax.experimental import pallas as pl
from jax.experimental.pallas import tpu as pltpu

_LANE = 128


def _round_up(x, m):
    return ((x + m - 1) // m) * m


def _pad2d(x, rows, cols):
    r, c = x.shape
    if r == rows and c == cols:
        return x
    return jnp.pad(x, ((0, rows - r), (0, cols - c)))


def _vmem_cap_bytes():
    # Generation-aware ceiling (~3/4 of per-core physical VMEM); v7x-safe fallback.
    try:
        return int(pltpu.get_tpu_info().vmem_capacity_bytes * 3 // 4)
    except Exception:
        return 48 << 20


def _choose_bm(n):
    # Keep >= 2 row blocks so both v7x TensorCores get work under
    # dimension_semantics=("parallel", ...); bigger row blocks for large N to fill
    # the 256x256 MXU (v6e/v7x) and amortize per-step overhead.
    if n >= 4096:
        return 512
    if n >= 1024:
        return 256
    return 128


def _choose_bk(k_dim, bm, resident_bytes, out_block_bytes, extra_block_bytes):
    """Largest reduction tile (prefer bk == K -> no accumulator) that fits VMEM."""
    cap = _vmem_cap_bytes()
    for bk in (k_dim, 4096, 2048, 1024, 512, 256, 128):
        if bk > k_dim or k_dim % bk:
            continue
        acc_bytes = 0 if bk == k_dim else 4 * out_block_bytes
        need = (2 * resident_bytes           # resident B operands (conservative 2x)
                + 2 * bm * bk * 2            # streamed A block (bf16), double-buffered
                + 2 * out_block_bytes        # output block(s), double-buffered
                + 2 * extra_block_bytes      # extra streamed inputs (noise)
                + acc_bytes
                + (4 << 20))                 # headroom (metadata, internal scratch)
        if need <= cap:
            return bk
    return 128


def _vmem_limit(bm, bk, resident_bytes, out_block_bytes, extra_block_bytes, k_dim):
    # Per-call VMEM budget derived from actual block sizes, not a blanket fraction.
    acc_bytes = 0 if bk == k_dim else 4 * out_block_bytes
    need = (2 * resident_bytes + 2 * bm * bk * 2 + 2 * out_block_bytes
            + 2 * extra_block_bytes + acc_bytes + (4 << 20))
    return int(min(max(need, 16 << 20), _vmem_cap_bytes()))


def _compiler_params(vmem_limit):
    return pltpu.CompilerParams(
        dimension_semantics=("parallel", "arbitrary"),
        vmem_limit_bytes=vmem_limit,
    )


# ---------------------------------------------------------------------------
# Shared reduction skeleton:  result = A_rowblock @ B   (B fully VMEM-resident).
# When n_k == 1 there is no accumulator scratch and no init/finalize branch.
# When n_k > 1 the adj row slab is streamed over k; B is only *sliced*, never re-DMA'd.
# ---------------------------------------------------------------------------
def _reduce_dot(a_ref, b_ref, acc, bk, n_k, epilogue):
    if n_k == 1:
        epilogue(jnp.dot(a_ref[...], b_ref[...],
                         preferred_element_type=jnp.float32))
        return

    acc_ref = acc[0]
    k = pl.program_id(1)

    @pl.when(k == 0)
    def _():
        acc_ref[...] = jnp.zeros_like(acc_ref)

    kb = pl.multiple_of(k * bk, bk)
    acc_ref[...] += jnp.dot(a_ref[...], b_ref[pl.ds(kb, bk), :],
                            preferred_element_type=jnp.float32)

    @pl.when(k == n_k - 1)
    def _():
        epilogue(acc_ref[...])


def _xw_kernel(x_ref, w_ref, o_ref, *acc, bk, n_k):
    # Stage 1: xw0 = X @ W0
    def epi(res):
        o_ref[...] = res.astype(o_ref.dtype)

    _reduce_dot(x_ref, w_ref, acc, bk, n_k, epi)


def _hidden_hcat_kernel(adj_ref, xw0_ref, wcat_ref, o_ref, *acc, bk, n_k):
    # Stage 2 (+ fused stage 3): hcat = relu(adj @ xw0) @ [W_mu | W_sigma]
    def epi(res):
        hidden = jnp.maximum(res, 0.0).astype(wcat_ref.dtype)
        o_ref[...] = jnp.dot(hidden, wcat_ref[...],
                             preferred_element_type=jnp.float32).astype(o_ref.dtype)

    _reduce_dot(adj_ref, xw0_ref, acc, bk, n_k, epi)


def _reparam_kernel(adj_ref, hcat_ref, noise_ref, z_ref, msl_ref, *acc,
                    bk, n_k, d_pad):
    # Stage 3 (old 4): msl = adj @ hcat; mean,logstd = split(msl); z = noise*exp(logstd)+mean
    def epi(msl):
        mean = msl[:, :d_pad]                 # lane-tile-aligned split (d_pad % 128 == 0)
        logstd = msl[:, d_pad:]
        z_ref[...] = noise_ref[...] * jnp.exp(logstd) + mean
        msl_ref[...] = msl

    _reduce_dot(adj_ref, hcat_ref, acc, bk, n_k, epi)


# ---------------------------------------------------------------------------
# Wrapper
# ---------------------------------------------------------------------------
def prepare_batch_vgae_params(adj, w0, w_mu, w_sigma, *, compute_dtype=jnp.bfloat16):
    """Pad + cast the call-invariant tensors ONCE (adj is the largest tensor; padding /
    casting it inside the per-call jit would add an N^2 HBM read+write every forward)."""
    N = adj.shape[0]
    F, H = w0.shape
    D = w_mu.shape[1]
    assert w_sigma.shape == (H, D)

    bm = _choose_bm(N)
    Np = _round_up(N, bm)
    Fp = _round_up(F, _LANE)
    Hp = _round_up(H, _LANE)
    Dp = _round_up(D, _LANE)

    adjp = _pad2d(adj, Np, Np).astype(compute_dtype)
    w0p = _pad2d(w0, Fp, Hp).astype(compute_dtype)
    # Fused mean/logstd branches: one wide weight [W_mu | W_sigma] -> (Hp, 2*Dp).
    wcatp = jnp.concatenate(
        [_pad2d(w_mu, Hp, Dp), _pad2d(w_sigma, Hp, Dp)], axis=1
    ).astype(compute_dtype)

    dims = dict(N=N, F=F, H=H, D=D, bm=bm, Np=Np, Fp=Fp, Hp=Hp, Dp=Dp)
    return (adjp, w0p, wcatp), dims


def batch_vgae_forward(params, X, noise, *, dims, compute_dtype=jnp.bfloat16):
    """Returns (z, mean, logstd), each (N, D) float32."""
    adjp, w0p, wcatp = params
    N, D = dims["N"], dims["D"]
    bm, Np, Fp, Hp, Dp = dims["bm"], dims["Np"], dims["Fp"], dims["Hp"], dims["Dp"]

    Xp = _pad2d(X, Np, Fp).astype(compute_dtype)       # per-call input: pad/cast here
    noisep = _pad2d(noise, Np, Dp).astype(jnp.float32)

    rows = Np // bm

    # ---- Stage 1: xw0 = X @ W0 ------------------------------------------------
    resident1 = Fp * Hp * 2
    out_blk1 = bm * Hp * 2
    bk1 = _choose_bk(Fp, bm, resident1, out_blk1, 0)
    nk1 = Fp // bk1
    xw0 = pl.pallas_call(
        functools.partial(_xw_kernel, bk=bk1, n_k=nk1),
        out_shape=jax.ShapeDtypeStruct((Np, Hp), compute_dtype),
        grid=(rows, nk1),
        in_specs=[
            pl.BlockSpec((bm, bk1), lambda i, k: (i, k)),      # X row blocks, streamed
            pl.BlockSpec((Fp, Hp), lambda i, k: (0, 0)),       # W0 resident (DMA'd once)
        ],
        out_specs=pl.BlockSpec((bm, Hp), lambda i, k: (i, 0)),
        scratch_shapes=([] if nk1 == 1 else [pltpu.VMEM((bm, Hp), jnp.float32)]),
        compiler_params=_compiler_params(
            _vmem_limit(bm, bk1, resident1, out_blk1, 0, Fp)),
    )(Xp, w0p)

    # ---- Stage 2 (+3 fused): hcat = relu(adj @ xw0) @ [W_mu | W_sigma] --------
    resident2 = Np * Hp * 2 + Hp * (2 * Dp) * 2
    out_blk2 = bm * (2 * Dp) * 2
    bk2 = _choose_bk(Np, bm, resident2, out_blk2, 0)
    nk2 = Np // bk2
    hcat = pl.pallas_call(
        functools.partial(_hidden_hcat_kernel, bk=bk2, n_k=nk2),
        out_shape=jax.ShapeDtypeStruct((Np, 2 * Dp), compute_dtype),
        grid=(rows, nk2),
        in_specs=[
            pl.BlockSpec((bm, bk2), lambda i, k: (i, k)),        # adj row blocks, streamed
            pl.BlockSpec((Np, Hp), lambda i, k: (0, 0)),         # xw0 resident
            pl.BlockSpec((Hp, 2 * Dp), lambda i, k: (0, 0)),     # Wcat resident
        ],
        out_specs=pl.BlockSpec((bm, 2 * Dp), lambda i, k: (i, 0)),
        scratch_shapes=([] if nk2 == 1 else [pltpu.VMEM((bm, Hp), jnp.float32)]),
        compiler_params=_compiler_params(
            _vmem_limit(bm, bk2, resident2, out_blk2, 0, Np)),
    )(adjp, xw0, wcatp)

    # ---- Stage 3: msl = adj @ hcat ; reparameterization epilogue --------------
    resident3 = Np * (2 * Dp) * 2
    out_blk3 = bm * Dp * 4 + bm * (2 * Dp) * 4          # z + msl blocks (f32)
    noise_blk = bm * Dp * 4
    bk3 = _choose_bk(Np, bm, resident3, out_blk3, noise_blk)
    nk3 = Np // bk3
    z_p, msl_p = pl.pallas_call(
        functools.partial(_reparam_kernel, bk=bk3, n_k=nk3, d_pad=Dp),
        out_shape=(
            jax.ShapeDtypeStruct((Np, Dp), jnp.float32),          # z
            jax.ShapeDtypeStruct((Np, 2 * Dp), jnp.float32),      # [mean | logstd]
        ),
        grid=(rows, nk3),
        in_specs=[
            pl.BlockSpec((bm, bk3), lambda i, k: (i, k)),         # adj row blocks, streamed
            pl.BlockSpec((Np, 2 * Dp), lambda i, k: (0, 0)),      # hcat resident
            pl.BlockSpec((bm, Dp), lambda i, k: (i, 0)),          # noise (epilogue only)
        ],
        out_specs=(
            pl.BlockSpec((bm, Dp), lambda i, k: (i, 0)),
            pl.BlockSpec((bm, 2 * Dp), lambda i, k: (i, 0)),
        ),
        scratch_shapes=([] if nk3 == 1 else [pltpu.VMEM((bm, 2 * Dp), jnp.float32)]),
        compiler_params=_compiler_params(
            _vmem_limit(bm, bk3, resident3, out_blk3, noise_blk, Np)),
    )(adjp, hcat, noisep)

    z = z_p[:N, :D]
    mean = msl_p[:N, :D]
    logstd = msl_p[:N, Dp:Dp + D]
    return z, mean, logstd


def _glorot_init(key, input_dim, output_dim):
    init_range = np.sqrt(6.0 / (input_dim + output_dim))
    return jax.random.uniform(key, (input_dim, output_dim), jnp.float32,
                              minval=-init_range, maxval=init_range)


if __name__ == "__main__":
    # Shapes consistent with BatchVGAE defaults (dim=128, hidden_dim=200);
    # N deliberately not a multiple of 128 to exercise the padding path.
    num_nodes = 200   # N ; node features are (N, num_nodes)
    hidden_dim = 200  # H
    dim = 128         # D

    key = jax.random.PRNGKey(0)
    k_x, k_adj, k_w0, k_wmu, k_wsig, k_noise = jax.random.split(key, 6)

    # Node features and symmetric-normalized adjacency with self-loops.
    X = jax.random.normal(k_x, (num_nodes, num_nodes), jnp.float32)
    A = (jax.random.uniform(k_adj, (num_nodes, num_nodes)) > 0.7).astype(jnp.float32)
    A = jnp.clip(A + A.T, 0.0, 1.0)
    A = jnp.clip(A + jnp.eye(num_nodes, dtype=jnp.float32), 0.0, 1.0)
    d_inv_sqrt = 1.0 / jnp.sqrt(A.sum(axis=1))
    adj = A * d_inv_sqrt[:, None] * d_inv_sqrt[None, :]

    # Parameters (glorot) and pre-sampled gaussian noise (replaces torch.randn in encode()).
    w0 = _glorot_init(k_w0, num_nodes, hidden_dim)
    w_mu = _glorot_init(k_wmu, hidden_dim, dim)
    w_sigma = _glorot_init(k_wsig, hidden_dim, dim)
    noise = jax.random.normal(k_noise, (num_nodes, dim), jnp.float32)

    # Call-invariant tensors (adj, weights) are padded/cast ONCE, outside the jit.
    params, dims = prepare_batch_vgae_params(adj, w0, w_mu, w_sigma)
    fwd = jax.jit(functools.partial(batch_vgae_forward, dims=dims))
    z, mean, logstd = jax.block_until_ready(fwd(params, X, noise))

    # Pure-JAX reference with the SAME bf16 matmul operands / f32 accumulation recipe
    # as the kernel (intermediates stored bf16), for tight tolerance checks.
    cd = jnp.bfloat16
    xw0_r = jnp.dot(X.astype(cd), w0.astype(cd),
                    preferred_element_type=jnp.float32).astype(cd)
    hid_r = jnp.maximum(jnp.dot(adj.astype(cd), xw0_r,
                                preferred_element_type=jnp.float32), 0.0).astype(cd)
    wcat = jnp.concatenate([w_mu, w_sigma], axis=1)
    hcat_r = jnp.dot(hid_r, wcat.astype(cd),
                     preferred_element_type=jnp.float32).astype(cd)
    msl_r = jnp.dot(adj.astype(cd), hcat_r, preferred_element_type=jnp.float32)
    mean_r, logstd_r = msl_r[:, :dim], msl_r[:, dim:]
    z_r = noise * jnp.exp(logstd_r) + mean_r

    z_np, mean_np, logstd_np = map(np.asarray, (z, mean, logstd))
    assert np.all(np.isfinite(z_np))
    np.testing.assert_allclose(mean_np, np.asarray(mean_r), rtol=1e-2, atol=1e-2)
    np.testing.assert_allclose(logstd_np, np.asarray(logstd_r), rtol=1e-2, atol=1e-2)
    np.testing.assert_allclose(z_np, np.asarray(z_r), rtol=1e-2, atol=1e-2)

    print("KERNEL_OK")
</pallas_src>

<mosaic_0001>
module attributes {stable_mosaic.version = 11 : i64} {
  func.func @_hidden_hcat_kernel(%arg0: i32, %arg1: i32, %arg2: memref<128x256xbf16, #tpu.memory_space<vmem>>, %arg3: memref<256x256xbf16, #tpu.memory_space<vmem>>, %arg4: memref<256x256xbf16, #tpu.memory_space<vmem>>, %arg5: memref<128x256xbf16, #tpu.memory_space<vmem>>) attributes {dimension_semantics = [#tpu.dimension_semantics<parallel>, #tpu.dimension_semantics<arbitrary>], iteration_bounds = array<i64: 2, 1>, scalar_prefetch = 0 : i64, scratch_operands = 0 : i64, tpu.core_type = #tpu.core_type<tc>, window_params = [{transform_indices = @transform_0, window_bounds = array<i64: 128, 256>}, {pipeline_mode = #tpu.pipeline_mode<synchronous>, transform_indices = @transform_1, window_bounds = array<i64: 256, 256>}, {pipeline_mode = #tpu.pipeline_mode<synchronous>, transform_indices = @transform_2, window_bounds = array<i64: 256, 256>}, {transform_indices = @transform_3, window_bounds = array<i64: 128, 256>}]} {
    %c0 = arith.constant 0 : index
    %c0_0 = arith.constant 0 : index
    %0 = vector.load %arg2[%c0, %c0_0] : memref<128x256xbf16, #tpu.memory_space<vmem>>, vector<128x256xbf16>
    %c0_1 = arith.constant 0 : index
    %c0_2 = arith.constant 0 : index
    %1 = vector.load %arg3[%c0_1, %c0_2] : memref<256x256xbf16, #tpu.memory_space<vmem>>, vector<256x256xbf16>
    %cst = arith.constant dense<0.000000e+00> : vector<128x256xf32>
    %2 = tpu.matmul %0, %1, %cst {dimension_numbers = #tpu.dot_dimension_numbers<[1], [0], [0], [1], [0, 0, 1, 1], [], []>} : vector<128x256xbf16>, vector<256x256xbf16>, vector<128x256xf32> -> vector<128x256xf32>
    %cst_3 = arith.constant 0.000000e+00 : f32
    %3 = vector.broadcast %cst_3 : f32 to vector<128x256xf32>
    %4 = arith.maximumf %2, %3 : vector<128x256xf32>
    %5 = arith.truncf %4 : vector<128x256xf32> to vector<128x256xbf16>
    %c0_4 = arith.constant 0 : index
    %c0_5 = arith.constant 0 : index
    %6 = vector.load %arg4[%c0_4, %c0_5] : memref<256x256xbf16, #tpu.memory_space<vmem>>, vector<256x256xbf16>
    %cst_6 = arith.constant dense<0.000000e+00> : vector<128x256xf32>
    %7 = tpu.matmul %5, %6, %cst_6 {dimension_numbers = #tpu.dot_dimension_numbers<[1], [0], [0], [1], [0, 0, 1, 1], [], []>} : vector<128x256xbf16>, vector<256x256xbf16>, vector<128x256xf32> -> vector<128x256xf32>
    %8 = arith.truncf %7 : vector<128x256xf32> to vector<128x256xbf16>
    %c0_7 = arith.constant 0 : index
    %c0_8 = arith.constant 0 : index
    %9 = vector.load %arg5[%c0_7, %c0_8] : memref<128x256xbf16, #tpu.memory_space<vmem>>, vector<128x256xbf16>
    tpu.vector_store %arg5[%c0_7, %c0_8], %8 {strides = array<i32>} : memref<128x256xbf16, #tpu.memory_space<vmem>>, vector<128x256xbf16>,
    return
  }
  func.func @transform_0(%arg0: i32, %arg1: i32) -> (i32, i32) {
    %c0_i32 = arith.constant 0 : i32
    return %arg0, %arg1 : i32, i32
  }
  func.func @transform_1(%arg0: i32, %arg1: i32) -> (i32, i32) {
    %c0_i32 = arith.constant 0 : i32
    %c0_i32_0 = arith.constant 0 : i32
    %c0_i32_1 = arith.constant 0 : i32
    return %c0_i32, %c0_i32_0 : i32, i32
  }
  func.func @transform_2(%arg0: i32, %arg1: i32) -> (i32, i32) {
    %c0_i32 = arith.constant 0 : i32
    %c0_i32_0 = arith.constant 0 : i32
    %c0_i32_1 = arith.constant 0 : i32
    return %c0_i32, %c0_i32_0 : i32, i32
  }
  func.func @transform_3(%arg0: i32, %arg1: i32) -> (i32, i32) {
    %c0_i32 = arith.constant 0 : i32
    %c0_i32_0 = arith.constant 0 : i32
    return %arg0, %c0_i32 : i32, i32
  }
}

module attributes {stable_mosaic.version = 11 : i64} {
  func.func @_xw_kernel(%arg0: i32, %arg1: i32, %arg2: memref<128x256xbf16, #tpu.memory_space<vmem>>, %arg3: memref<256x256xbf16, #tpu.memory_space<vmem>>, %arg4: memref<128x256xbf16, #tpu.memory_space<vmem>>) attributes {dimension_semantics = [#tpu.dimension_semantics<parallel>, #tpu.dimension_semantics<arbitrary>], iteration_bounds = array<i64: 2, 1>, scalar_prefetch = 0 : i64, scratch_operands = 0 : i64, tpu.core_type = #tpu.core_type<tc>, window_params = [{transform_indices = @transform_0, window_bounds = array<i64: 128, 256>}, {pipeline_mode = #tpu.pipeline_mode<synchronous>, transform_indices = @transform_1, window_bounds = array<i64: 256, 256>}, {transform_indices = @transform_2, window_bounds = array<i64: 128, 256>}]} {
    %c0 = arith.constant 0 : index
    %c0_0 = arith.constant 0 : index
    %0 = vector.load %arg2[%c0, %c0_0] : memref<128x256xbf16, #tpu.memory_space<vmem>>, vector<128x256xbf16>
    %c0_1 = arith.constant 0 : index
    %c0_2 = arith.constant 0 : index
    %1 = vector.load %arg3[%c0_1, %c0_2] : memref<256x256xbf16, #tpu.memory_space<vmem>>, vector<256x256xbf16>
    %cst = arith.constant dense<0.000000e+00> : vector<128x256xf32>
    %2 = tpu.matmul %0, %1, %cst {dimension_numbers = #tpu.dot_dimension_numbers<[1], [0], [0], [1], [0, 0, 1, 1], [], []>} : vector<128x256xbf16>, vector<256x256xbf16>, vector<128x256xf32> -> vector<128x256xf32>
    %3 = arith.truncf %2 : vector<128x256xf32> to vector<128x256xbf16>
    %c0_3 = arith.constant 0 : index
    %c0_4 = arith.constant 0 : index
    %4 = vector.load %arg4[%c0_3, %c0_4] : memref<128x256xbf16, #tpu.memory_space<vmem>>, vector<128x256xbf16>
    tpu.vector_store %arg4[%c0_3, %c0_4], %3 {strides = array<i32>} : memref<128x256xbf16, #tpu.memory_space<vmem>>, vector<128x256xbf16>,
    return
  }
  func.func @transform_0(%arg0: i32, %arg1: i32) -> (i32, i32) {
    %c0_i32 = arith.constant 0 : i32
    return %arg0, %arg1 : i32, i32
  }
  func.func @transform_1(%arg0: i32, %arg1: i32) -> (i32, i32) {
    %c0_i32 = arith.constant 0 : i32
    %c0_i32_0 = arith.constant 0 : i32
    %c0_i32_1 = arith.constant 0 : i32
    return %c0_i32, %c0_i32_0 : i32, i32
  }
  func.func @transform_2(%arg0: i32, %arg1: i32) -> (i32, i32) {
    %c0_i32 = arith.constant 0 : i32
    %c0_i32_0 = arith.constant 0 : i32
    return %arg0, %c0_i32 : i32, i32
  }
}

module attributes {stable_mosaic.version = 11 : i64} {
  func.func @_reparam_kernel(%arg0: i32, %arg1: i32, %arg2: memref<128x256xbf16, #tpu.memory_space<vmem>>, %arg3: memref<256x256xbf16, #tpu.memory_space<vmem>>, %arg4: memref<128x128xf32, #tpu.memory_space<vmem>>, %arg5: memref<128x128xf32, #tpu.memory_space<vmem>>, %arg6: memref<128x256xf32, #tpu.memory_space<vmem>>) attributes {dimension_semantics = [#tpu.dimension_semantics<parallel>, #tpu.dimension_semantics<arbitrary>], iteration_bounds = array<i64: 2, 1>, scalar_prefetch = 0 : i64, scratch_operands = 0 : i64, tpu.core_type = #tpu.core_type<tc>, window_params = [{transform_indices = @transform_0, window_bounds = array<i64: 128, 256>}, {pipeline_mode = #tpu.pipeline_mode<synchronous>, transform_indices = @transform_1, window_bounds = array<i64: 256, 256>}, {transform_indices = @transform_2, window_bounds = array<i64: 128, 128>}, {transform_indices = @transform_3, window_bounds = array<i64: 128, 128>}, {transform_indices = @transform_4, window_bounds = array<i64: 128, 256>}]} {
    %c0 = arith.constant 0 : index
    %c0_0 = arith.constant 0 : index
    %0 = vector.load %arg2[%c0, %c0_0] : memref<128x256xbf16, #tpu.memory_space<vmem>>, vector<128x256xbf16>
    %c0_1 = arith.constant 0 : index
    %c0_2 = arith.constant 0 : index
    %1 = vector.load %arg3[%c0_1, %c0_2] : memref<256x256xbf16, #tpu.memory_space<vmem>>, vector<256x256xbf16>
    %cst = arith.constant dense<0.000000e+00> : vector<128x256xf32>
    %2 = tpu.matmul %0, %1, %cst {dimension_numbers = #tpu.dot_dimension_numbers<[1], [0], [0], [1], [0, 0, 1, 1], [], []>} : vector<128x256xbf16>, vector<256x256xbf16>, vector<128x256xf32> -> vector<128x256xf32>
    %3 = vector.extract_strided_slice %2 {offsets = [0, 0], sizes = [128, 128], strides = [1, 1]} : vector<128x256xf32> to vector<128x128xf32>
    %4 = vector.extract_strided_slice %2 {offsets = [0, 128], sizes = [128, 128], strides = [1, 1]} : vector<128x256xf32> to vector<128x128xf32>
    %c0_3 = arith.constant 0 : index
    %c0_4 = arith.constant 0 : index
    %5 = vector.load %arg4[%c0_3, %c0_4] : memref<128x128xf32, #tpu.memory_space<vmem>>, vector<128x128xf32>
    %6 = math.exp %4 : vector<128x128xf32>
    %7 = arith.mulf %5, %6 : vector<128x128xf32>
    %8 = arith.addf %7, %3 : vector<128x128xf32>
    %c0_5 = arith.constant 0 : index
    %c0_6 = arith.constant 0 : index
    %9 = vector.load %arg5[%c0_5, %c0_6] : memref<128x128xf32, #tpu.memory_space<vmem>>, vector<128x128xf32>
    tpu.vector_store %arg5[%c0_5, %c0_6], %8 {strides = array<i32>} : memref<128x128xf32, #tpu.memory_space<vmem>>, vector<128x128xf32>,
    %c0_7 = arith.constant 0 : index
    %c0_8 = arith.constant 0 : index
    %10 = vector.load %arg6[%c0_7, %c0_8] : memref<128x256xf32, #tpu.memory_space<vmem>>, vector<128x256xf32>
    tpu.vector_store %arg6[%c0_7, %c0_8], %2 {strides = array<i32>} : memref<128x256xf32, #tpu.memory_space<vmem>>, vector<128x256xf32>,
    return
  }
  func.func @transform_0(%arg0: i32, %arg1: i32) -> (i32, i32) {
    %c0_i32 = arith.constant 0 : i32
    return %arg0, %arg1 : i32, i32
  }
  func.func @transform_1(%arg0: i32, %arg1: i32) -> (i32, i32) {
    %c0_i32 = arith.constant 0 : i32
    %c0_i32_0 = arith.constant 0 : i32
    %c0_i32_1 = arith.constant 0 : i32
    return %c0_i32, %c0_i32_0 : i32, i32
  }
  func.func @transform_2(%arg0: i32, %arg1: i32) -> (i32, i32) {
    %c0_i32 = arith.constant 0 : i32
    %c0_i32_0 = arith.constant 0 : i32
    return %arg0, %c0_i32 : i32, i32
  }
  func.func @transform_3(%arg0: i32, %arg1: i32) -> (i32, i32) {
    %c0_i32 = arith.constant 0 : i32
    %c0_i32_0 = arith.constant 0 : i32
    return %arg0, %c0_i32 : i32, i32
  }
  func.func @transform_4(%arg0: i32, %arg1: i32) -> (i32, i32) {
    %c0_i32 = arith.constant 0 : i32
    %c0_i32_0 = arith.constant 0 : i32
    return %arg0, %c0_i32 : i32, i32
  }
}

</mosaic_0001>

<llo_original>
// kernel: batch_vgae_forward.5
$region0: #{batch_vgae_forward.5}
  #allocation0 [shape = 'u32[]', space=smem, size = 0x4, offset = 0x4, fixed_abs, tag = 'smem constant byte address 0x4 - core index']
  #allocation1 [shape = 'u32[72,128]{1,0:T(1,128)}', space=vmem, size = 0x9000, scoped, tag = 'internal scratch']
  %s0 = inlined_call_operand.vmem [shape: bf16[256,256], index: 0, kind: input, shape index: {}]
  %s1 = inlined_call_operand.vmem [shape: bf16[256,256], index: 1, kind: input, shape index: {}]
  %s2 = inlined_call_operand.vmem [shape: f32[256,128], index: 2, kind: input, shape index: {}]
  %s3 = inlined_call_operand.vmem [shape: f32[256,128], index: 3, kind: output, shape index: {0}]
  %s4 = inlined_call_operand.vmem [shape: f32[256,256], index: 4, kind: output, shape index: {1}]
  %5 = xla_tuple %s3, %s4
  %s6 = sld [smem:[#allocation0]]
  $region53: #{batch_vgae_forward.5} parent=0
    _
  %s8 = ssub.s32 1, %s6
  %s9 = scalar_select 0, %s8, %s6
  loop: start=0, step=1, limit=4
  $region2: #{batch_vgae_forward.5} parent=0 // loop_pre_header
    _
  $region3: #{batch_vgae_forward.5} parent=0 // loop_header
    %s11 = sphi 0, %s15
    %p12 = scmp.ge.s32.totalorder %s11, 4
    %s18 = sphi 0, %s30
    %s19 = sphi 0, %s26
    %s20 = sphi 0, %s18
    %s21 = sphi 0, %s19
    %s22 = sphi 0, %s20
    %s23 = sphi 0, %s21
    %s35 = sphi 0, %s37
    %s38 = sphi 0, %s35
    %s39 = sphi 0, %s38
    %s55 = sphi 0, %s39
    %s59 = sphi 0, %s59
    %s61 = sphi 0, %s59
    %s62 = sphi 0, %s61
    %s76 = sphi 0, %s62
    %s82 = sphi 0, %s84
    %s85 = sphi 0, %s82
    %s86 = sphi 0, %s85
    %s102 = sphi 0, %s86
    %s108 = sphi 0, %s110
    %s111 = sphi 0, %s108
    %s112 = sphi 0, %s111
    %s128 = sphi 0, %s112
    %s134 = sphi 0, %s136
    %s137 = sphi 0, %s134
    %s138 = sphi 0, %s137
    %s154 = sphi 0, %s138
  $region4: #{batch_vgae_forward.5} parent=0 // loop_header_branch
    %14 = sbr.rel (%p12) target = $region8
  $region5: #{batch_vgae_forward.5} parent=0 // loop_body
    %s16 = ssub.s32 %s11, 1
    %s17 = ssub.s32 %s11, 2
    %s24 = sadd.s32 1, %s19
    %p25 = scmp.ge.s32.totalorder %s24, 1
    %s26 = scalar_select %p25, 0, %s24
    %s27 = sadd.s32 1, %s18
    %s28 = scalar_select %p25, %s27, %s18
    %p29 = scmp.ge.s32.totalorder %s28, 2
    %s30 = scalar_select %p29, 0, %s28
    %s31 = ssub.s32 %s18, %s30
    %s32 = ssub.s32 %s19, %s26
    %s33 = sor.u32 %s31, %s32
    %p34 = scmp.eq.s32.totalorder %s33, 0
    %s36 = sadd.s32 %s35, 1
    %s37 = scalar_select %p34, %s35, %s36
    %p40 = pneg %p34
    %p41 = scmp.eq.s32.totalorder %s11, 1
    %p42 = por %p40, %p41
    %p43 = scmp.ne.s32.totalorder %s35, %s38
    %p44 = scmp.eq.s32.totalorder %s11, 0
    %p45 = por %p43, %p44
    %p46 = scmp.ne.s32.totalorder %s35, %s38
    %p47 = scmp.eq.s32.totalorder %s16, 1
    %p48 = por %p46, %p47
    %p49 = scmp.ne.s32.totalorder %s38, %s39
    %p50 = scmp.eq.s32.totalorder %s16, 0
    %p51 = por %p49, %p50
    %p52 = scmp.ne.s32.totalorder %s38, %s39
    %p53 = scmp.eq.s32.totalorder %s17, 1
    %p54 = por %p52, %p53
    %p56 = scmp.ne.s32.totalorder %s39, %s55
    %p57 = scmp.eq.s32.totalorder %s17, 0
    %p58 = por %p56, %p57
    %s60 = sadd.s32 %s59, 1
    %p63 = scmp.eq.s32.totalorder %s11, 1
    %p64 = scmp.ne.s32.totalorder %s59, %s61
    %p65 = scmp.eq.s32.totalorder %s11, 0
    %p66 = por %p64, %p65
    %p67 = scmp.ne.s32.totalorder %s59, %s61
    %p68 = scmp.eq.s32.totalorder %s16, 1
    %p69 = por %p67, %p68
    %p70 = scmp.ne.s32.totalorder %s61, %s62
    %p71 = scmp.eq.s32.totalorder %s16, 0
    %p72 = por %p70, %p71
    %p73 = scmp.ne.s32.totalorder %s61, %s62
    %p74 = scmp.eq.s32.totalorder %s17, 1
    %p75 = por %p73, %p74
    %p77 = scmp.ne.s32.totalorder %s62, %s76
    %p78 = scmp.eq.s32.totalorder %s17, 0
    %p79 = por %p77, %p78
    %s80 = ssub.s32 %s18, %s30
    %p81 = scmp.eq.s32.totalorder %s80, 0
    %s83 = sadd.s32 %s82, 1
    %s84 = scalar_select %p81, %s82, %s83
    %p87 = pneg %p81
    %p88 = scmp.eq.s32.totalorder %s11, 1
    %p89 = por %p87, %p88
    %p90 = scmp.ne.s32.totalorder %s82, %s85
    %p91 = scmp.eq.s32.totalorder %s11, 0
    %p92 = por %p90, %p91
    %p93 = scmp.ne.s32.totalorder %s82, %s85
    %p94 = scmp.eq.s32.totalorder %s16, 1
    %p95 = por %p93, %p94
    %p96 = scmp.ne.s32.totalorder %s85, %s86
    %p97 = scmp.eq.s32.totalorder %s16, 0
    %p98 = por %p96, %p97
    %p99 = scmp.ne.s32.totalorder %s85, %s86
    %p100 = scmp.eq.s32.totalorder %s17, 1
    %p101 = por %p99, %p100
    %p103 = scmp.ne.s32.totalorder %s86, %s102
    %p104 = scmp.eq.s32.totalorder %s17, 0
    %p105 = por %p103, %p104
    %s106 = ssub.s32 %s18, %s30
    %p107 = scmp.eq.s32.totalorder %s106, 0
    %s109 = sadd.s32 %s108, 1
    %s110 = scalar_select %p107, %s108, %s109
    %p113 = pneg %p107
    %p114 = scmp.eq.s32.totalorder %s11, 1
    %p115 = por %p113, %p114
    %p116 = scmp.ne.s32.totalorder %s108, %s111
    %p117 = scmp.eq.s32.totalorder %s11, 0
    %p118 = por %p116, %p117
    %p119 = scmp.ne.s32.totalorder %s108, %s111
    %p120 = scmp.eq.s32.totalorder %s16, 1
    %p121 = por %p119, %p120
    %p122 = scmp.ne.s32.totalorder %s111, %s112
    %p123 = scmp.eq.s32.totalorder %s16, 0
    %p124 = por %p122, %p123
    %p125 = scmp.ne.s32.totalorder %s111, %s112
    %p126 = scmp.eq.s32.totalorder %s17, 1
    %p127 = por %p125, %p126
    %p129 = scmp.ne.s32.totalorder %s112, %s128
    %p130 = scmp.eq.s32.totalorder %s17, 0
    %p131 = por %p129, %p130
    %s132 = ssub.s32 %s18, %s30
    %p133 = scmp.eq.s32.totalorder %s132, 0
    %s135 = sadd.s32 %s134, 1
    %s136 = scalar_select %p133, %s134, %s135
    %p139 = pneg %p133
    %p140 = scmp.eq.s32.totalorder %s11, 1
    %p141 = por %p139, %p140
    %p142 = scmp.ne.s32.totalorder %s134, %s137
    %p143 = scmp.eq.s32.totalorder %s11, 0
    %p144 = por %p142, %p143
    %p145 = scmp.ne.s32.totalorder %s134, %s137
    %p146 = scmp.eq.s32.totalorder %s16, 1
    %p147 = por %p145, %p146
    %p148 = scmp.ne.s32.totalorder %s137, %s138
    %p149 = scmp.eq.s32.totalorder %s16, 0
    %p150 = por %p148, %p149
    %p151 = scmp.ne.s32.totalorder %s137, %s138
    %p152 = scmp.eq.s32.totalorder %s17, 1
    %p153 = por %p151, %p152
    %p155 = scmp.ne.s32.totalorder %s138, %s154
    %p156 = scmp.eq.s32.totalorder %s17, 0
    %p157 = por %p155, %p156
    %p158 = scmp.le.s32.totalorder 1, %s11
    %p159 = scmp.lt.s32.totalorder %s11, 3
    %p160 = pnand %p158, %p159
    %p161 = pneg %p160
    // Predicated region
    $region9: #{batch_vgae_forward.5} parent=5 // pred_check
      _
    $region10: #{batch_vgae_forward.5} parent=5 // pred_check_branch
      %163 = sbr.rel (%p160) target = $region12
    $region11: #{batch_vgae_forward.5} parent=5 // pred_region
      %s164 = ssub.s32 %s11, 1
      // Predicated region
      $region13: #{batch_vgae_forward.5} parent=11 // pred_check
        %p165 = pneg %p72
      $region14: #{batch_vgae_forward.5} parent=11 // pred_check_branch
        %167 = sbr.rel (%p165) target = $region16
      $region15: #{batch_vgae_forward.5} parent=11 // pred_region
        _
      $region16: #{batch_vgae_forward.5} parent=11 // pred_fallthru
        _
    $region12: #{batch_vgae_forward.5} parent=5 // pred_fallthru
      _
    %p168 = scmp.lt.s32.totalorder %s11, 2
    // Predicated region
    $region17: #{batch_vgae_forward.5} parent=5 // pred_check
      %p169 = pneg %p168
    $region18: #{batch_vgae_forward.5} parent=5 // pred_check_branch
      %171 = sbr.rel (%p169) target = $region20
    $region19: #{batch_vgae_forward.5} parent=5 // pred_region
      // Predicated region
      $region21: #{batch_vgae_forward.5} parent=19 // pred_check
        %p172 = pneg %p45
      $region22: #{batch_vgae_forward.5} parent=19 // pred_check_branch
        %174 = sbr.rel (%p172) target = $region24
      $region23: #{batch_vgae_forward.5} parent=19 // pred_region
        %s175 = smul.u32 16, %s18
        %s176 = smul.u32 2, %s19
        %p177 = scmp.lt.s32.totalorder %s175, 31
        %s178 = scalar_select %p177, %s175, 31
        %p179 = scmp.lt.s32.totalorder %s176, 1
        %s180 = scalar_select %p179, %s176, 1
        %s181 = smul.addr %s178, 2
        %s182 = sadd.s32 %s180, %s181
        %s183 = smul.addr %s182, 4
        %s184 = scalar_lea.vmem %s0, %s183
        %s185 = smul.u32 16, %s18
        %s186 = smul.u32 2, %s19
      $region24: #{batch_vgae_forward.5} parent=19 // pred_fallthru
        _
      // Predicated region
      $region25: #{batch_vgae_forward.5} parent=19 // pred_check
        %p187 = pneg %p92
      $region26: #{batch_vgae_forward.5} parent=19 // pred_check_branch
        %189 = sbr.rel (%p187) target = $region28
      $region27: #{batch_vgae_forward.5} parent=19 // pred_region
        %s190 = smul.u32 16, %s18
        %p191 = scmp.lt.s32.totalorder %s190, 31
        %s192 = scalar_select %p191, %s190, 31
        %s193 = smul.addr %s192, 8
        %s194 = scalar_lea.vmem %s2, %s193
        %s195 = smul.u32 16, %s18
      $region28: #{batch_vgae_forward.5} parent=19 // pred_fallthru
        _
    $region20: #{batch_vgae_forward.5} parent=5 // pred_fallthru
      _
    %p196 = scmp.le.s32.totalorder 1, %s11
    %p197 = scmp.lt.s32.totalorder %s11, 3
    %p198 = pnand %p196, %p197
    %p199 = pneg %p198
    // Predicated region
    $region29: #{batch_vgae_forward.5} parent=5 // pred_check
      _
    $region30: #{batch_vgae_forward.5} parent=5 // pred_check_branch
      %201 = sbr.rel (%p198) target = $region32
    $region31: #{batch_vgae_forward.5} parent=5 // pred_region
      %s202 = ssub.s32 %s11, 1
      %s203 = smul.u32 16, %s20
      %s204 = smul.u32 2, %s21
      %p205 = scmp.lt.s32.totalorder %s203, 31
      %s206 = scalar_select %p205, %s203, 31
      %p207 = scmp.lt.s32.totalorder %s204, 1
      %s208 = scalar_select %p207, %s204, 1
      %s209 = smul.addr %s206, 2
      %s210 = sadd.s32 %s208, %s209
      %s211 = smul.addr %s210, 4
      %s212 = scalar_lea.vmem %s0, %s211
      %p213 = pneg %p51
      %p214 = pneg %p48
      %p215 = pneg %p72
      %p216 = pneg %p69
      %s217 = smul.u32 16, %s20
      %p218 = scmp.lt.s32.totalorder %s217, 31
      %s219 = scalar_select %p218, %s217, 31
      %s220 = smul.addr %s219, 8
      %s221 = scalar_lea.vmem %s2, %s220
      %p222 = pneg %p98
      %p223 = pneg %p95
      %p224 = pneg %p124
      %p225 = pneg %p121
      %s226 = smul.u32 16, %s20
      %p227 = scmp.lt.s32.totalorder %s226, 31
      %s228 = scalar_select %p227, %s226, 31
      %s229 = smul.addr %s228, 8
      %s230 = scalar_lea.vmem %s3, %s229
      %p231 = pneg %p150
      %p232 = pneg %p147
      %s233 = smul.u32 16, %s20
      %p234 = scmp.lt.s32.totalorder %s233, 31
      %s235 = scalar_select %p234, %s233, 31
      %s236 = smul.addr %s235, 2
      %s237 = smul.addr %s236, 8
      %s238 = scalar_lea.vmem %s4, %s237
      %s239 = smul.u32 16, %s20
      %s240 = smul.u32 2, %s21
      %p241 = scmp.lt.s32.totalorder %s239, 31
      %s242 = scalar_select %p241, %s239, 31
      %p243 = scmp.lt.s32.totalorder %s240, 1
      %s244 = scalar_select %p243, %s240, 1
      %s245 = smul.addr %s242, 2
      %s246 = sadd.s32 %s244, %s245
      %s247 = smul.addr %s246, 4
      %s248 = scalar_lea.vmem %s0, %s247
      %s249 = smul.u32 16, %s20
      %s250 = smul.u32 2, %s21
      %s251 = smul.u32 16, %s20
      %p252 = scmp.lt.s32.totalorder %s251, 31
      %s253 = scalar_select %p252, %s251, 31
      %s254 = smul.addr %s253, 8
      %s255 = scalar_lea.vmem %s2, %s254
      %s256 = smul.u32 16, %s20
      %s257 = smul.u32 16, %s20
      %p258 = scmp.lt.s32.totalorder %s257, 31
      %s259 = scalar_select %p258, %s257, 31
      %s260 = smul.addr %s259, 8
      %s261 = scalar_lea.vmem %s3, %s260
      %s262 = smul.u32 16, %s20
      %s263 = smul.u32 16, %s20
      %p264 = scmp.lt.s32.totalorder %s263, 31
      %s265 = scalar_select %p264, %s263, 31
      %s266 = smul.addr %s265, 2
      %s267 = smul.addr %s266, 8
      %s268 = scalar_lea.vmem %s4, %s267
      %s269 = smul.u32 16, %s20
      %v270 = vld [vmem:[%s248] sm:$0xff]
      %v271 = vld [vmem:[%s248 + $0x8] sm:$0xff]
      %v272 = vld [vmem:[%s248 + $0x10] sm:$0xff]
      %v273 = vld [vmem:[%s248 + $0x18] sm:$0xff]
      %v274 = vld [vmem:[%s248 + $0x20] sm:$0xff]
      %v275 = vld [vmem:[%s248 + $0x28] sm:$0xff]
      %v276 = vld [vmem:[%s248 + $0x30] sm:$0xff]
      %v277 = vld [vmem:[%s248 + $0x38] sm:$0xff]
      %v278 = vld [vmem:[%s248 + $0x40] sm:$0xff]
      %v279 = vld [vmem:[%s248 + $0x48] sm:$0xff]
      %v280 = vld [vmem:[%s248 + $0x50] sm:$0xff]
      %v281 = vld [vmem:[%s248 + $0x58] sm:$0xff]
      %v282 = vld [vmem:[%s248 + $0x60] sm:$0xff]
      %v283 = vld [vmem:[%s248 + $0x68] sm:$0xff]
      %v284 = vld [vmem:[%s248 + $0x70] sm:$0xff]
      %v285 = vld [vmem:[%s248 + $0x78] sm:$0xff]
      %v286 = vld [vmem:[%s1] sm:$0xff]
      %v287 = vld [vmem:[%s1 + $0x8] sm:$0xff]
      %v288 = vld [vmem:[%s1 + $0x10] sm:$0xff]
      %v289 = vld [vmem:[%s1 + $0x18] sm:$0xff]
      %v290 = vld [vmem:[%s1 + $0x20] sm:$0xff]
      %v291 = vld [vmem:[%s1 + $0x28] sm:$0xff]
      %v292 = vld [vmem:[%s1 + $0x30] sm:$0xff]
      %v293 = vld [vmem:[%s1 + $0x38] sm:$0xff]
      %v294 = vld [vmem:[%s1 + $0x40] sm:$0xff]
      %v295 = vld [vmem:[%s1 + $0x48] sm:$0xff]
      %v296 = vld [vmem:[%s1 + $0x50] sm:$0xff]
      %v297 = vld [vmem:[%s1 + $0x58] sm:$0xff]
      %v298 = vld [vmem:[%s1 + $0x60] sm:$0xff]
      %v299 = vld [vmem:[%s1 + $0x68] sm:$0xff]
      %v300 = vld [vmem:[%s1 + $0x70] sm:$0xff]
      %v301 = vld [vmem:[%s1 + $0x78] sm:$0xff]
      %v302 = vld [vmem:[%s1 + $0x80] sm:$0xff]
      %v303 = vld [vmem:[%s1 + $0x88] sm:$0xff]
      %v304 = vld [vmem:[%s1 + $0x90] sm:$0xff]
      %v305 = vld [vmem:[%s1 + $0x98] sm:$0xff]
      %v306 = vld [vmem:[%s1 + $0xa0] sm:$0xff]
      %v307 = vld [vmem:[%s1 + $0xa8] sm:$0xff]
      %v308 = vld [vmem:[%s1 + $0xb0] sm:$0xff]
      %v309 = vld [vmem:[%s1 + $0xb8] sm:$0xff]
      %v310 = vld [vmem:[%s1 + $0xc0] sm:$0xff]
      %v311 = vld [vmem:[%s1 + $0xc8] sm:$0xff]
      %v312 = vld [vmem:[%s1 + $0xd0] sm:$0xff]
      %v313 = vld [vmem:[%s1 + $0xd8] sm:$0xff]
      %v314 = vld [vmem:[%s1 + $0xe0] sm:$0xff]
      %v315 = vld [vmem:[%s1 + $0xe8] sm:$0xff]
      %v316 = vld [vmem:[%s1 + $0xf0] sm:$0xff]
      %v317 = vld [vmem:[%s1 + $0xf8] sm:$0xff]
      %v334 = vunpack.c.l.b16 %v270
      %v335 = vunpack.c.h.b16 %v270
      %v336 = vunpack.c.l.b16 %v271
      %v337 = vunpack.c.h.b16 %v271
      %v338 = vunpack.c.l.b16 %v272
      %v339 = vunpack.c.h.b16 %v272
      %v340 = vunpack.c.l.b16 %v273
      %v341 = vunpack.c.h.b16 %v273
      %v342 = vunpack.c.l.b16 %v274
      %v343 = vunpack.c.h.b16 %v274
      %v344 = vunpack.c.l.b16 %v275
      %v345 = vunpack.c.h.b16 %v275
      %v346 = vunpack.c.l.b16 %v276
      %v347 = vunpack.c.h.b16 %v276
      %v348 = vunpack.c.l.b16 %v277
      %v349 = vunpack.c.h.b16 %v277
      %v350 = vunpack.c.l.b16 %v278
      %v351 = vunpack.c.h.b16 %v278
      %v352 = vunpack.c.l.b16 %v279
      %v353 = vunpack.c.h.b16 %v279
      %v354 = vunpack.c.l.b16 %v280
      %v355 = vunpack.c.h.b16 %v280
      %v356 = vunpack.c.l.b16 %v281
      %v357 = vunpack.c.h.b16 %v281
      %v358 = vunpack.c.l.b16 %v282
      %v359 = vunpack.c.h.b16 %v282
      %v360 = vunpack.c.l.b16 %v283
      %v361 = vunpack.c.h.b16 %v283
      %v362 = vunpack.c.l.b16 %v284
      %v363 = vunpack.c.h.b16 %v284
      %v364 = vunpack.c.l.b16 %v285
      %v365 = vunpack.c.h.b16 %v285
      %v366 = vpack.c.b16 %v336, %v334
      %v367 = vpack.c.b16 %v337, %v335
      %v368 = vpack.c.b16 %v340, %v338
      %v369 = vpack.c.b16 %v341, %v339
      %v370 = vpack.c.b16 %v344, %v342
      %v371 = vpack.c.b16 %v345, %v343
      %v372 = vpack.c.b16 %v348, %v346
      %v373 = vpack.c.b16 %v349, %v347
      %v374 = vpack.c.b16 %v352, %v350
      %v375 = vpack.c.b16 %v353, %v351
      %v376 = vpack.c.b16 %v356, %v354
      %v377 = vpack.c.b16 %v357, %v355
      %v378 = vpack.c.b16 %v360, %v358
      %v379 = vpack.c.b16 %v361, %v359
      %v380 = vpack.c.b16 %v364, %v362
      %v381 = vpack.c.b16 %v365, %v363
      %v430 = vunpack.c.l.b16 %v286
      %v431 = vunpack.c.h.b16 %v286
      %v432 = vunpack.c.l.b16 %v287
      %v433 = vunpack.c.h.b16 %v287
      %v434 = vunpack.c.l.b16 %v288
      %v435 = vunpack.c.h.b16 %v288
      %v436 = vunpack.c.l.b16 %v289
      %v437 = vunpack.c.h.b16 %v289
      %v438 = vunpack.c.l.b16 %v290
      %v439 = vunpack.c.h.b16 %v290
      %v440 = vunpack.c.l.b16 %v291
      %v441 = vunpack.c.h.b16 %v291
      %v442 = vunpack.c.l.b16 %v292
      %v443 = vunpack.c.h.b16 %v292
      %v444 = vunpack.c.l.b16 %v293
      %v445 = vunpack.c.h.b16 %v293
      %v446 = vunpack.c.l.b16 %v294
      %v447 = vunpack.c.h.b16 %v294
      %v448 = vunpack.c.l.b16 %v295
      %v449 = vunpack.c.h.b16 %v295
      %v450 = vunpack.c.l.b16 %v296
      %v451 = vunpack.c.h.b16 %v296
      %v452 = vunpack.c.l.b16 %v297
      %v453 = vunpack.c.h.b16 %v297
      %v454 = vunpack.c.l.b16 %v298
      %v455 = vunpack.c.h.b16 %v298
      %v456 = vunpack.c.l.b16 %v299
      %v457 = vunpack.c.h.b16 %v299
      %v458 = vunpack.c.l.b16 %v300
      %v459 = vunpack.c.h.b16 %v300
      %v460 = vunpack.c.l.b16 %v301
      %v461 = vunpack.c.h.b16 %v301
      %v462 = vunpack.c.l.b16 %v302
      %v463 = vunpack.c.h.b16 %v302
      %v464 = vunpack.c.l.b16 %v303
      %v465 = vunpack.c.h.b16 %v303
      %v466 = vunpack.c.l.b16 %v304
      %v467 = vunpack.c.h.b16 %v304
      %v468 = vunpack.c.l.b16 %v305
      %v469 = vunpack.c.h.b16 %v305
      %v470 = vunpack.c.l.b16 %v306
      %v471 = vunpack.c.h.b16 %v306
      %v472 = vunpack.c.l.b16 %v307
      %v473 = vunpack.c.h.b16 %v307
      %v474 = vunpack.c.l.b16 %v308
      %v475 = vunpack.c.h.b16 %v308
      %v476 = vunpack.c.l.b16 %v309
      %v477 = vunpack.c.h.b16 %v309
      %v478 = vunpack.c.l.b16 %v310
      %v479 = vunpack.c.h.b16 %v310
      %v480 = vunpack.c.l.b16 %v311
      %v481 = vunpack.c.h.b16 %v311
      %v482 = vunpack.c.l.b16 %v312
      %v483 = vunpack.c.h.b16 %v312
      %v484 = vunpack.c.l.b16 %v313
      %v485 = vunpack.c.h.b16 %v313
      %v486 = vunpack.c.l.b16 %v314
      %v487 = vunpack.c.h.b16 %v314
      %v488 = vunpack.c.l.b16 %v315
      %v489 = vunpack.c.h.b16 %v315
      %v490 = vunpack.c.l.b16 %v316
      %v491 = vunpack.c.h.b16 %v316
      %v492 = vunpack.c.l.b16 %v317
      %v493 = vunpack.c.h.b16 %v317
      %v494 = vpack.c.b16 %v432, %v430
      %v495 = vpack.c.b16 %v433, %v431
      %v496 = vpack.c.b16 %v436, %v434
      %v497 = vpack.c.b16 %v437, %v435
      %v498 = vpack.c.b16 %v440, %v438
      %v499 = vpack.c.b16 %v441, %v439
      %v500 = vpack.c.b16 %v444, %v442
      %v501 = vpack.c.b16 %v445, %v443
      %v502 = vpack.c.b16 %v448, %v446
      %v503 = vpack.c.b16 %v449, %v447
      %v504 = vpack.c.b16 %v452, %v450
      %v505 = vpack.c.b16 %v453, %v451
      %v506 = vpack.c.b16 %v456, %v454
      %v507 = vpack.c.b16 %v457, %v455
      %v508 = vpack.c.b16 %v460, %v458
      %v509 = vpack.c.b16 %v461, %v459
      %v510 = vpack.c.b16 %v464, %v462
      %v511 = vpack.c.b16 %v465, %v463
      %v512 = vpack.c.b16 %v468, %v466
      %v513 = vpack.c.b16 %v469, %v467
      %v514 = vpack.c.b16 %v472, %v470
      %v515 = vpack.c.b16 %v473, %v471
      %v516 = vpack.c.b16 %v476, %v474
      %v517 = vpack.c.b16 %v477, %v475
      %v518 = vpack.c.b16 %v480, %v478
      %v519 = vpack.c.b16 %v481, %v479
      %v520 = vpack.c.b16 %v484, %v482
      %v521 = vpack.c.b16 %v485, %v483
      %v522 = vpack.c.b16 %v488, %v486
      %v523 = vpack.c.b16 %v489, %v487
      %v524 = vpack.c.b16 %v492, %v490
      %v525 = vpack.c.b16 %v493, %v491
      %558 = vmatpush.bf16.msra.mxu0 %v508
      %559 = vmatpush.bf16.msra.mxu0 %v506
      %560 = vmatpush.bf16.msra.mxu0 %v504
      %561 = vmatpush.bf16.msra.mxu0 %v502
      %562 = vmatpush.bf16.msra.mxu0 %v500
      %563 = vmatpush.bf16.msra.mxu0 %v498
      %564 = vmatpush.bf16.msra.mxu0 %v496
      %565 = vmatpush.bf16.msra.mxu0 %v494
      %566 = vmatmul.bf16.gmra.mxu0 %v366
      %v567 = vpop.f32.mrf.mxu0
      %v568 = vadd.f32 0.0, %v567
      %v569 = vpop.f32.mrf.mxu0
      %v570 = vadd.f32 0.0, %v569
      %571 = vmatmul.bf16.gmra.mxu0 %v368
      %v572 = vpop.f32.mrf.mxu0
      %v573 = vadd.f32 0.0, %v572
      %v574 = vpop.f32.mrf.mxu0
      %v575 = vadd.f32 0.0, %v574
      %576 = vmatmul.bf16.gmra.mxu0 %v370
      %v577 = vpop.f32.mrf.mxu0
      %v578 = vadd.f32 0.0, %v577
      %v579 = vpop.f32.mrf.mxu0
      %v580 = vadd.f32 0.0, %v579
      %581 = vmatmul.bf16.gmra.mxu0 %v372
      %v582 = vpop.f32.mrf.mxu0
      %v583 = vadd.f32 0.0, %v582
      %v584 = vpop.f32.mrf.mxu0
      %v585 = vadd.f32 0.0, %v584
      %586 = vmatmul.bf16.gmra.mxu0 %v374
      %v587 = vpop.f32.mrf.mxu0
      %v588 = vadd.f32 0.0, %v587
      %v589 = vpop.f32.mrf.mxu0
      %v590 = vadd.f32 0.0, %v589
      %591 = vmatmul.bf16.gmra.mxu0 %v376
      %v592 = vpop.f32.mrf.mxu0
      %v593 = vadd.f32 0.0, %v592
      %v594 = vpop.f32.mrf.mxu0
      %v595 = vadd.f32 0.0, %v594
      %596 = vmatmul.bf16.gmra.mxu0 %v378
      %v597 = vpop.f32.mrf.mxu0
      %v598 = vadd.f32 0.0, %v597
      %v599 = vpop.f32.mrf.mxu0
      %v600 = vadd.f32 0.0, %v599
      %601 = vmatmul.bf16.gmra.mxu0 %v380
      %v602 = vpop.f32.mrf.mxu0
      %v603 = vadd.f32 0.0, %v602
      %v604 = vpop.f32.mrf.mxu0
      %v605 = vadd.f32 0.0, %v604
      %606 = vdwg.mxu0
      %607 = vmatpush.bf16.msra.mxu0 %v524
      %608 = vmatpush.bf16.msra.mxu0 %v522
      %609 = vmatpush.bf16.msra.mxu0 %v520
      %610 = vmatpush.bf16.msra.mxu0 %v518
      %611 = vmatpush.bf16.msra.mxu0 %v516
      %612 = vmatpush.bf16.msra.mxu0 %v514
      %613 = vmatpush.bf16.msra.mxu0 %v512
      %614 = vmatpush.bf16.msra.mxu0 %v510
      %615 = vmatmul.bf16.gmra.mxu0 %v367
      %v616 = vpop.f32.mrf.mxu0
      %v617 = vadd.f32 %v568, %v616
      %v618 = vpop.f32.mrf.mxu0
      %v619 = vadd.f32 %v570, %v618
      %620 = vmatmul.bf16.gmra.mxu0 %v369
      %v621 = vpop.f32.mrf.mxu0
      %v622 = vadd.f32 %v573, %v621
      %v623 = vpop.f32.mrf.mxu0
      %v624 = vadd.f32 %v575, %v623
      %625 = vmatmul.bf16.gmra.mxu0 %v371
      %v626 = vpop.f32.mrf.mxu0
      %v627 = vadd.f32 %v578, %v626
      %v628 = vpop.f32.mrf.mxu0
      %v629 = vadd.f32 %v580, %v628
      %630 = vmatmul.bf16.gmra.mxu0 %v373
      %v631 = vpop.f32.mrf.mxu0
      %v632 = vadd.f32 %v583, %v631
      %v633 = vpop.f32.mrf.mxu0
      %v634 = vadd.f32 %v585, %v633
      %635 = vmatmul.bf16.gmra.mxu0 %v375
      %v636 = vpop.f32.mrf.mxu0
      %v637 = vadd.f32 %v588, %v636
      %v638 = vpop.f32.mrf.mxu0
      %v639 = vadd.f32 %v590, %v638
      %640 = vmatmul.bf16.gmra.mxu0 %v377
      %v641 = vpop.f32.mrf.mxu0
      %v642 = vadd.f32 %v593, %v641
      %v643 = vpop.f32.mrf.mxu0
      %v644 = vadd.f32 %v595, %v643
      %645 = vmatmul.bf16.gmra.mxu0 %v379
      %v646 = vpop.f32.mrf.mxu0
      %v647 = vadd.f32 %v598, %v646
      %v648 = vpop.f32.mrf.mxu0
      %v649 = vadd.f32 %v600, %v648
      %650 = vmatmul.bf16.gmra.mxu0 %v381
      %v651 = vpop.f32.mrf.mxu0
      %v652 = vadd.f32 %v603, %v651
      %v653 = vpop.f32.mrf.mxu0
      %v654 = vadd.f32 %v605, %v653
      %655 = vdwg.mxu0
      %656 = vmatpush.bf16.msra.mxu0 %v509
      %657 = vmatpush.bf16.msra.mxu0 %v507
      %658 = vmatpush.bf16.msra.mxu0 %v505
      %659 = vmatpush.bf16.msra.mxu0 %v503
      %660 = vmatpush.bf16.msra.mxu0 %v501
      %661 = vmatpush.bf16.msra.mxu0 %v499
      %662 = vmatpush.bf16.msra.mxu0 %v497
      %663 = vmatpush.bf16.msra.mxu0 %v495
      %664 = vmatmul.bf16.gmra.mxu0 %v366
      %v665 = vpop.f32.mrf.mxu0
      %v666 = vadd.f32 0.0, %v665
      %v667 = vpop.f32.mrf.mxu0
      %v668 = vadd.f32 0.0, %v667
      %669 = vmatmul.bf16.gmra.mxu0 %v368
      %v670 = vpop.f32.mrf.mxu0
      %v671 = vadd.f32 0.0, %v670
      %v672 = vpop.f32.mrf.mxu0
      %v673 = vadd.f32 0.0, %v672
      %674 = vmatmul.bf16.gmra.mxu0 %v370
      %v675 = vpop.f32.mrf.mxu0
      %v676 = vadd.f32 0.0, %v675
      %v677 = vpop.f32.mrf.mxu0
      %v678 = vadd.f32 0.0, %v677
      %679 = vmatmul.bf16.gmra.mxu0 %v372
      %v680 = vpop.f32.mrf.mxu0
      %v681 = vadd.f32 0.0, %v680
      %v682 = vpop.f32.mrf.mxu0
      %v683 = vadd.f32 0.0, %v682
      %684 = vmatmul.bf16.gmra.mxu0 %v374
      %v685 = vpop.f32.mrf.mxu0
      %v686 = vadd.f32 0.0, %v685
      %v687 = vpop.f32.mrf.mxu0
      %v688 = vadd.f32 0.0, %v687
      %689 = vmatmul.bf16.gmra.mxu0 %v376
      %v690 = vpop.f32.mrf.mxu0
      %v691 = vadd.f32 0.0, %v690
      %v692 = vpop.f32.mrf.mxu0
      %v693 = vadd.f32 0.0, %v692
      %694 = vmatmul.bf16.gmra.mxu0 %v378
      %v695 = vpop.f32.mrf.mxu0
      %v696 = vadd.f32 0.0, %v695
      %v697 = vpop.f32.mrf.mxu0
      %v698 = vadd.f32 0.0, %v697
      %699 = vmatmul.bf16.gmra.mxu0 %v380
      %v700 = vpop.f32.mrf.mxu0
      %v701 = vadd.f32 0.0, %v700
      %v702 = vpop.f32.mrf.mxu0
      %v703 = vadd.f32 0.0, %v702
      %704 = vdwg.mxu0
      %705 = vmatpush.bf16.msra.mxu0 %v525
      %706 = vmatpush.bf16.msra.mxu0 %v523
      %707 = vmatpush.bf16.msra.mxu0 %v521
      %708 = vmatpush.bf16.msra.mxu0 %v519
      %709 = vmatpush.bf16.msra.mxu0 %v517
      %710 = vmatpush.bf16.msra.mxu0 %v515
      %711 = vmatpush.bf16.msra.mxu0 %v513
      %712 = vmatpush.bf16.msra.mxu0 %v511
      %713 = vmatmul.bf16.gmra.mxu0 %v367
      %v714 = vpop.f32.mrf.mxu0
      %v715 = vadd.f32 %v666, %v714
      %v716 = vpop.f32.mrf.mxu0
      %v717 = vadd.f32 %v668, %v716
      %718 = vmatmul.bf16.gmra.mxu0 %v369
      %v719 = vpop.f32.mrf.mxu0
      %v720 = vadd.f32 %v671, %v719
      %v721 = vpop.f32.mrf.mxu0
      %v722 = vadd.f32 %v673, %v721
      %723 = vmatmul.bf16.gmra.mxu0 %v371
      %v724 = vpop.f32.mrf.mxu0
      %v725 = vadd.f32 %v676, %v724
      %v726 = vpop.f32.mrf.mxu0
      %v727 = vadd.f32 %v678, %v726
      %728 = vmatmul.bf16.gmra.mxu0 %v373
      %v729 = vpop.f32.mrf.mxu0
      %v730 = vadd.f32 %v681, %v729
      %v731 = vpop.f32.mrf.mxu0
      %v732 = vadd.f32 %v683, %v731
      %733 = vmatmul.bf16.gmra.mxu0 %v375
      %v734 = vpop.f32.mrf.mxu0
      %v735 = vadd.f32 %v686, %v734
      %v736 = vpop.f32.mrf.mxu0
      %v737 = vadd.f32 %v688, %v736
      %738 = vmatmul.bf16.gmra.mxu0 %v377
      %v739 = vpop.f32.mrf.mxu0
      %v740 = vadd.f32 %v691, %v739
      %v741 = vpop.f32.mrf.mxu0
      %v742 = vadd.f32 %v693, %v741
      %743 = vmatmul.bf16.gmra.mxu0 %v379
      %v744 = vpop.f32.mrf.mxu0
      %v745 = vadd.f32 %v696, %v744
      %v746 = vpop.f32.mrf.mxu0
      %v747 = vadd.f32 %v698, %v746
      %748 = vmatmul.bf16.gmra.mxu0 %v381
      %v749 = vpop.f32.mrf.mxu0
      %v750 = vadd.f32 %v701, %v749
      %v751 = vpop.f32.mrf.mxu0
      %v752 = vadd.f32 %v703, %v751
      %753 = vdwg.mxu0
      %v754 = vld [vmem:[%s255] sm:$0xff]
      %v755 = vld [vmem:[%s255 + $0x8] sm:$0xff]
      %v756 = vld [vmem:[%s255 + $0x10] sm:$0xff]
      %v757 = vld [vmem:[%s255 + $0x18] sm:$0xff]
      %v758 = vld [vmem:[%s255 + $0x20] sm:$0xff]
      %v759 = vld [vmem:[%s255 + $0x28] sm:$0xff]
      %v760 = vld [vmem:[%s255 + $0x30] sm:$0xff]
      %v761 = vld [vmem:[%s255 + $0x38] sm:$0xff]
      %v762 = vld [vmem:[%s255 + $0x40] sm:$0xff]
      %v763 = vld [vmem:[%s255 + $0x48] sm:$0xff]
      %v764 = vld [vmem:[%s255 + $0x50] sm:$0xff]
      %v765 = vld [vmem:[%s255 + $0x58] sm:$0xff]
      %v766 = vld [vmem:[%s255 + $0x60] sm:$0xff]
      %v767 = vld [vmem:[%s255 + $0x68] sm:$0xff]
      %v768 = vld [vmem:[%s255 + $0x70] sm:$0xff]
      %v769 = vld [vmem:[%s255 + $0x78] sm:$0xff]
      %v770 = vmul.f32 %v715, 1.442695
      %v771 = vpow.pop %v770
      %v772 = vmul.f32 %v717, 1.442695
      %v773 = vpow.pop %v772
      %v774 = vmul.f32 %v720, 1.442695
      %v775 = vpow.pop %v774
      %v776 = vmul.f32 %v722, 1.442695
      %v777 = vpow.pop %v776
      %v778 = vmul.f32 %v725, 1.442695
      %v779 = vpow.pop %v778
      %v780 = vmul.f32 %v727, 1.442695
      %v781 = vpow.pop %v780
      %v782 = vmul.f32 %v730, 1.442695
      %v783 = vpow.pop %v782
      %v784 = vmul.f32 %v732, 1.442695
      %v785 = vpow.pop %v784
      %v786 = vmul.f32 %v735, 1.442695
      %v787 = vpow.pop %v786
      %v788 = vmul.f32 %v737, 1.442695
      %v789 = vpow.pop %v788
      %v790 = vmul.f32 %v740, 1.442695
      %v791 = vpow.pop %v790
      %v792 = vmul.f32 %v742, 1.442695
      %v793 = vpow.pop %v792
      %v794 = vmul.f32 %v745, 1.442695
      %v795 = vpow.pop %v794
      %v796 = vmul.f32 %v747, 1.442695
      %v797 = vpow.pop %v796
      %v798 = vmul.f32 %v750, 1.442695
      %v799 = vpow.pop %v798
      %v800 = vmul.f32 %v752, 1.442695
      %v801 = vpow.pop %v800
      %v802 = vmul.f32 %v754, %v771
      %v803 = vmul.f32 %v755, %v773
      %v804 = vmul.f32 %v756, %v775
      %v805 = vmul.f32 %v757, %v777
      %v806 = vmul.f32 %v758, %v779
      %v807 = vmul.f32 %v759, %v781
      %v808 = vmul.f32 %v760, %v783
      %v809 = vmul.f32 %v761, %v785
      %v810 = vmul.f32 %v762, %v787
      %v811 = vmul.f32 %v763, %v789
      %v812 = vmul.f32 %v764, %v791
      %v813 = vmul.f32 %v765, %v793
      %v814 = vmul.f32 %v766, %v795
      %v815 = vmul.f32 %v767, %v797
      %v816 = vmul.f32 %v768, %v799
      %v817 = vmul.f32 %v769, %v801
      %v818 = vadd.f32 %v802, %v617
      %v819 = vadd.f32 %v803, %v619
      %v820 = vadd.f32 %v804, %v622
      %v821 = vadd.f32 %v805, %v624
      %v822 = vadd.f32 %v806, %v627
      %v823 = vadd.f32 %v807, %v629
      %v824 = vadd.f32 %v808, %v632
      %v825 = vadd.f32 %v809, %v634
      %v826 = vadd.f32 %v810, %v637
      %v827 = vadd.f32 %v811, %v639
      %v828 = vadd.f32 %v812, %v642
      %v829 = vadd.f32 %v813, %v644
      %v830 = vadd.f32 %v814, %v647
      %v831 = vadd.f32 %v815, %v649
      %v832 = vadd.f32 %v816, %v652
      %v833 = vadd.f32 %v817, %v654
      %834 = vst [vmem:[%s261] sm:$0xff] %v818
      %835 = vst [vmem:[%s261 + $0x8] sm:$0xff] %v819
      %836 = vst [vmem:[%s261 + $0x10] sm:$0xff] %v820
      %837 = vst [vmem:[%s261 + $0x18] sm:$0xff] %v821
      %838 = vst [vmem:[%s261 + $0x20] sm:$0xff] %v822
      %839 = vst [vmem:[%s261 + $0x28] sm:$0xff] %v823
      %840 = vst [vmem:[%s261 + $0x30] sm:$0xff] %v824
      %841 = vst [vmem:[%s261 + $0x38] sm:$0xff] %v825
      %842 = vst [vmem:[%s261 + $0x40] sm:$0xff] %v826
      %843 = vst [vmem:[%s261 + $0x48] sm:$0xff] %v827
      %844 = vst [vmem:[%s261 + $0x50] sm:$0xff] %v828
      %845 = vst [vmem:[%s261 + $0x58] sm:$0xff] %v829
      %846 = vst [vmem:[%s261 + $0x60] sm:$0xff] %v830
      %847 = vst [vmem:[%s261 + $0x68] sm:$0xff] %v831
      %848 = vst [vmem:[%s261 + $0x70] sm:$0xff] %v832
      %849 = vst [vmem:[%s261 + $0x78] sm:$0xff] %v833
      %850 = vst [vmem:[%s268] sm:$0xff] %v617
      %851 = vst [vmem:[%s268 + $0x8] sm:$0xff] %v715
      %852 = vst [vmem:[%s268 + $0x10] sm:$0xff] %v619
      %853 = vst [vmem:[%s268 + $0x18] sm:$0xff] %v717
      %854 = vst [vmem:[%s268 + $0x20] sm:$0xff] %v622
      %855 = vst [vmem:[%s268 + $0x28] sm:$0xff] %v720
      %856 = vst [vmem:[%s268 + $0x30] sm:$0xff] %v624
      %857 = vst [vmem:[%s268 + $0x38] sm:$0xff] %v722
      %858 = vst [vmem:[%s268 + $0x40] sm:$0xff] %v627
      %859 = vst [vmem:[%s268 + $0x48] sm:$0xff] %v725
      %860 = vst [vmem:[%s268 + $0x50] sm:$0xff] %v629
      %861 = vst [vmem:[%s268 + $0x58] sm:$0xff] %v727
      %862 = vst [vmem:[%s268 + $0x60] sm:$0xff] %v632
      %863 = vst [vmem:[%s268 + $0x68] sm:$0xff] %v730
      %864 = vst [vmem:[%s268 + $0x70] sm:$0xff] %v634
      %865 = vst [vmem:[%s268 + $0x78] sm:$0xff] %v732
      %866 = vst [vmem:[%s268 + $0x80] sm:$0xff] %v637
      %867 = vst [vmem:[%s268 + $0x88] sm:$0xff] %v735
      %868 = vst [vmem:[%s268 + $0x90] sm:$0xff] %v639
      %869 = vst [vmem:[%s268 + $0x98] sm:$0xff] %v737
      %870 = vst [vmem:[%s268 + $0xa0] sm:$0xff] %v642
      %871 = vst [vmem:[%s268 + $0xa8] sm:$0xff] %v740
      %872 = vst [vmem:[%s268 + $0xb0] sm:$0xff] %v644
      %873 = vst [vmem:[%s268 + $0xb8] sm:$0xff] %v742
      %874 = vst [vmem:[%s268 + $0xc0] sm:$0xff] %v647
      %875 = vst [vmem:[%s268 + $0xc8] sm:$0xff] %v745
      %876 = vst [vmem:[%s268 + $0xd0] sm:$0xff] %v649
      %877 = vst [vmem:[%s268 + $0xd8] sm:$0xff] %v747
      %878 = vst [vmem:[%s268 + $0xe0] sm:$0xff] %v652
      %879 = vst [vmem:[%s268 + $0xe8] sm:$0xff] %v750
      %880 = vst [vmem:[%s268 + $0xf0] sm:$0xff] %v654
      %881 = vst [vmem:[%s268 + $0xf8] sm:$0xff] %v752
      %s882 = smul.u32 16, %s20
      %p883 = scmp.lt.s32.totalorder %s882, 31
      %s884 = scalar_select %p883, %s882, 31
      %s885 = smul.addr %s884, 8
      %s886 = scalar_lea.vmem %s3, %s885
      %s887 = smul.u32 16, %s20
      %p888 = scmp.lt.s32.totalorder %s887, 31
      %s889 = scalar_select %p888, %s887, 31
      %s890 = smul.addr %s889, 2
      %s891 = smul.addr %s890, 8
      %s892 = scalar_lea.vmem %s4, %s891
      // Predicated region
      $region33: #{batch_vgae_forward.5} parent=31 // pred_check
        %p893 = pneg %p121
      $region34: #{batch_vgae_forward.5} parent=31 // pred_check_branch
        %895 = sbr.rel (%p893) target = $region36
      $region35: #{batch_vgae_forward.5} parent=31 // pred_region
        %s896 = smul.u32 16, %s20
      $region36: #{batch_vgae_forward.5} parent=31 // pred_fallthru
        _
      // Predicated region
      $region37: #{batch_vgae_forward.5} parent=31 // pred_check
        %p897 = pneg %p147
      $region38: #{batch_vgae_forward.5} parent=31 // pred_check_branch
        %899 = sbr.rel (%p897) target = $region40
      $region39: #{batch_vgae_forward.5} parent=31 // pred_region
        %s900 = smul.u32 16, %s20
      $region40: #{batch_vgae_forward.5} parent=31 // pred_fallthru
        _
    $region32: #{batch_vgae_forward.5} parent=5 // pred_fallthru
      _
    %p901 = scmp.le.s32.totalorder 2, %s11
    // Predicated region
    $region41: #{batch_vgae_forward.5} parent=5 // pred_check
      %p902 = pneg %p901
    $region42: #{batch_vgae_forward.5} parent=5 // pred_check_branch
      %904 = sbr.rel (%p902) target = $region44
    $region43: #{batch_vgae_forward.5} parent=5 // pred_region
      %s905 = ssub.s32 %s11, 2
      // Predicated region
      $region45: #{batch_vgae_forward.5} parent=43 // pred_check
        %p906 = pneg %p127
      $region46: #{batch_vgae_forward.5} parent=43 // pred_check_branch
        %908 = sbr.rel (%p906) target = $region48
      $region47: #{batch_vgae_forward.5} parent=43 // pred_region
        %s909 = smul.u32 16, %s22
        %p910 = scmp.lt.s32.totalorder %s909, 31
        %s911 = scalar_select %p910, %s909, 31
        %s912 = smul.addr %s911, 8
        %s913 = scalar_lea.vmem %s3, %s912
      $region48: #{batch_vgae_forward.5} parent=43 // pred_fallthru
        _
      // Predicated region
      $region49: #{batch_vgae_forward.5} parent=43 // pred_check
        %p914 = pneg %p153
      $region50: #{batch_vgae_forward.5} parent=43 // pred_check_branch
        %916 = sbr.rel (%p914) target = $region52
      $region51: #{batch_vgae_forward.5} parent=43 // pred_region
        %s917 = smul.u32 16, %s22
        %p918 = scmp.lt.s32.totalorder %s917, 31
        %s919 = scalar_select %p918, %s917, 31
        %s920 = smul.addr %s919, 2
        %s921 = smul.addr %s920, 8
        %s922 = scalar_lea.vmem %s4, %s921
      $region52: #{batch_vgae_forward.5} parent=43 // pred_fallthru
        _
    $region44: #{batch_vgae_forward.5} parent=5 // pred_fallthru
      _
  $region6: #{batch_vgae_forward.5} parent=0 // loop_footer
    %s15 = sadd.s32 1, %s11
  $region7: #{batch_vgae_forward.5} parent=0 // loop_footer_branch
    %10 = sbr.rel target = $region3
  $region8: #{batch_vgae_forward.5} parent=0 // loop_exit
    _

// kernel: batch_vgae_forward.3
$region0: #{batch_vgae_forward.3}
  #allocation0 [shape = 'u32[]', space=smem, size = 0x4, offset = 0x4, fixed_abs, tag = 'smem constant byte address 0x4 - core index']
  #allocation1 [shape = 'u32[72,128]{1,0:T(1,128)}', space=vmem, size = 0x9000, scoped, tag = 'internal scratch']
  %s0 = inlined_call_operand.vmem [shape: bf16[256,256], index: 0, kind: input, shape index: {}]
  %s1 = inlined_call_operand.vmem [shape: bf16[256,256], index: 1, kind: input, shape index: {}]
  %s2 = inlined_call_operand.vmem [shape: bf16[256,256], index: 2, kind: output, shape index: {}]
  %s3 = sld [smem:[#allocation0]]
  $region41: #{batch_vgae_forward.3} parent=0
    _
  %s5 = ssub.s32 1, %s3
  %s6 = scalar_select 0, %s5, %s3
  loop: start=0, step=1, limit=4
  $region2: #{batch_vgae_forward.3} parent=0 // loop_pre_header
    _
  $region3: #{batch_vgae_forward.3} parent=0 // loop_header
    %s8 = sphi 0, %s12
    %p9 = scmp.ge.s32.totalorder %s8, 4
    %s15 = sphi 0, %s27
    %s16 = sphi 0, %s23
    %s17 = sphi 0, %s15
    %s18 = sphi 0, %s16
    %s19 = sphi 0, %s17
    %s20 = sphi 0, %s18
    %s32 = sphi 0, %s34
    %s35 = sphi 0, %s32
    %s36 = sphi 0, %s35
    %s52 = sphi 0, %s36
    %s56 = sphi 0, %s56
    %s58 = sphi 0, %s56
    %s59 = sphi 0, %s58
    %s73 = sphi 0, %s59
    %s79 = sphi 0, %s81
    %s82 = sphi 0, %s79
    %s83 = sphi 0, %s82
    %s99 = sphi 0, %s83
  $region4: #{batch_vgae_forward.3} parent=0 // loop_header_branch
    %11 = sbr.rel (%p9) target = $region8
  $region5: #{batch_vgae_forward.3} parent=0 // loop_body
    %s13 = ssub.s32 %s8, 1
    %s14 = ssub.s32 %s8, 2
    %s21 = sadd.s32 1, %s16
    %p22 = scmp.ge.s32.totalorder %s21, 1
    %s23 = scalar_select %p22, 0, %s21
    %s24 = sadd.s32 1, %s15
    %s25 = scalar_select %p22, %s24, %s15
    %p26 = scmp.ge.s32.totalorder %s25, 2
    %s27 = scalar_select %p26, 0, %s25
    %s28 = ssub.s32 %s15, %s27
    %s29 = ssub.s32 %s16, %s23
    %s30 = sor.u32 %s28, %s29
    %p31 = scmp.eq.s32.totalorder %s30, 0
    %s33 = sadd.s32 %s32, 1
    %s34 = scalar_select %p31, %s32, %s33
    %p37 = pneg %p31
    %p38 = scmp.eq.s32.totalorder %s8, 1
    %p39 = por %p37, %p38
    %p40 = scmp.ne.s32.totalorder %s32, %s35
    %p41 = scmp.eq.s32.totalorder %s8, 0
    %p42 = por %p40, %p41
    %p43 = scmp.ne.s32.totalorder %s32, %s35
    %p44 = scmp.eq.s32.totalorder %s13, 1
    %p45 = por %p43, %p44
    %p46 = scmp.ne.s32.totalorder %s35, %s36
    %p47 = scmp.eq.s32.totalorder %s13, 0
    %p48 = por %p46, %p47
    %p49 = scmp.ne.s32.totalorder %s35, %s36
    %p50 = scmp.eq.s32.totalorder %s14, 1
    %p51 = por %p49, %p50
    %p53 = scmp.ne.s32.totalorder %s36, %s52
    %p54 = scmp.eq.s32.totalorder %s14, 0
    %p55 = por %p53, %p54
    %s57 = sadd.s32 %s56, 1
    %p60 = scmp.eq.s32.totalorder %s8, 1
    %p61 = scmp.ne.s32.totalorder %s56, %s58
    %p62 = scmp.eq.s32.totalorder %s8, 0
    %p63 = por %p61, %p62
    %p64 = scmp.ne.s32.totalorder %s56, %s58
    %p65 = scmp.eq.s32.totalorder %s13, 1
    %p66 = por %p64, %p65
    %p67 = scmp.ne.s32.totalorder %s58, %s59
    %p68 = scmp.eq.s32.totalorder %s13, 0
    %p69 = por %p67, %p68
    %p70 = scmp.ne.s32.totalorder %s58, %s59
    %p71 = scmp.eq.s32.totalorder %s14, 1
    %p72 = por %p70, %p71
    %p74 = scmp.ne.s32.totalorder %s59, %s73
    %p75 = scmp.eq.s32.totalorder %s14, 0
    %p76 = por %p74, %p75
    %s77 = ssub.s32 %s15, %s27
    %p78 = scmp.eq.s32.totalorder %s77, 0
    %s80 = sadd.s32 %s79, 1
    %s81 = scalar_select %p78, %s79, %s80
    %p84 = pneg %p78
    %p85 = scmp.eq.s32.totalorder %s8, 1
    %p86 = por %p84, %p85
    %p87 = scmp.ne.s32.totalorder %s79, %s82
    %p88 = scmp.eq.s32.totalorder %s8, 0
    %p89 = por %p87, %p88
    %p90 = scmp.ne.s32.totalorder %s79, %s82
    %p91 = scmp.eq.s32.totalorder %s13, 1
    %p92 = por %p90, %p91
    %p93 = scmp.ne.s32.totalorder %s82, %s83
    %p94 = scmp.eq.s32.totalorder %s13, 0
    %p95 = por %p93, %p94
    %p96 = scmp.ne.s32.totalorder %s82, %s83
    %p97 = scmp.eq.s32.totalorder %s14, 1
    %p98 = por %p96, %p97
    %p100 = scmp.ne.s32.totalorder %s83, %s99
    %p101 = scmp.eq.s32.totalorder %s14, 0
    %p102 = por %p100, %p101
    %p103 = scmp.le.s32.totalorder 1, %s8
    %p104 = scmp.lt.s32.totalorder %s8, 3
    %p105 = pnand %p103, %p104
    %p106 = pneg %p105
    // Predicated region
    $region9: #{batch_vgae_forward.3} parent=5 // pred_check
      _
    $region10: #{batch_vgae_forward.3} parent=5 // pred_check_branch
      %108 = sbr.rel (%p105) target = $region12
    $region11: #{batch_vgae_forward.3} parent=5 // pred_region
      %s109 = ssub.s32 %s8, 1
      // Predicated region
      $region13: #{batch_vgae_forward.3} parent=11 // pred_check
        %p110 = pneg %p69
      $region14: #{batch_vgae_forward.3} parent=11 // pred_check_branch
        %112 = sbr.rel (%p110) target = $region16
      $region15: #{batch_vgae_forward.3} parent=11 // pred_region
        _
      $region16: #{batch_vgae_forward.3} parent=11 // pred_fallthru
        _
    $region12: #{batch_vgae_forward.3} parent=5 // pred_fallthru
      _
    %p113 = scmp.lt.s32.totalorder %s8, 2
    // Predicated region
    $region17: #{batch_vgae_forward.3} parent=5 // pred_check
      %p114 = pneg %p113
    $region18: #{batch_vgae_forward.3} parent=5 // pred_check_branch
      %116 = sbr.rel (%p114) target = $region20
    $region19: #{batch_vgae_forward.3} parent=5 // pred_region
      // Predicated region
      $region21: #{batch_vgae_forward.3} parent=19 // pred_check
        %p117 = pneg %p42
      $region22: #{batch_vgae_forward.3} parent=19 // pred_check_branch
        %119 = sbr.rel (%p117) target = $region24
      $region23: #{batch_vgae_forward.3} parent=19 // pred_region
        %s120 = smul.u32 16, %s15
        %s121 = smul.u32 2, %s16
        %p122 = scmp.lt.s32.totalorder %s120, 31
        %s123 = scalar_select %p122, %s120, 31
        %p124 = scmp.lt.s32.totalorder %s121, 1
        %s125 = scalar_select %p124, %s121, 1
        %s126 = smul.addr %s123, 2
        %s127 = sadd.s32 %s125, %s126
        %s128 = smul.addr %s127, 4
        %s129 = scalar_lea.vmem %s0, %s128
        %s130 = smul.u32 16, %s15
        %s131 = smul.u32 2, %s16
      $region24: #{batch_vgae_forward.3} parent=19 // pred_fallthru
        _
    $region20: #{batch_vgae_forward.3} parent=5 // pred_fallthru
      _
    %p132 = scmp.le.s32.totalorder 1, %s8
    %p133 = scmp.lt.s32.totalorder %s8, 3
    %p134 = pnand %p132, %p133
    %p135 = pneg %p134
    // Predicated region
    $region25: #{batch_vgae_forward.3} parent=5 // pred_check
      _
    $region26: #{batch_vgae_forward.3} parent=5 // pred_check_branch
      %137 = sbr.rel (%p134) target = $region28
    $region27: #{batch_vgae_forward.3} parent=5 // pred_region
      %s138 = ssub.s32 %s8, 1
      %s139 = smul.u32 16, %s17
      %s140 = smul.u32 2, %s18
      %p141 = scmp.lt.s32.totalorder %s139, 31
      %s142 = scalar_select %p141, %s139, 31
      %p143 = scmp.lt.s32.totalorder %s140, 1
      %s144 = scalar_select %p143, %s140, 1
      %s145 = smul.addr %s142, 2
      %s146 = sadd.s32 %s144, %s145
      %s147 = smul.addr %s146, 4
      %s148 = scalar_lea.vmem %s0, %s147
      %p149 = pneg %p48
      %p150 = pneg %p45
      %p151 = pneg %p69
      %p152 = pneg %p66
      %p153 = pneg %p95
      %p154 = pneg %p92
      %s155 = smul.u32 16, %s17
      %p156 = scmp.lt.s32.totalorder %s155, 31
      %s157 = scalar_select %p156, %s155, 31
      %s158 = smul.addr %s157, 2
      %s159 = smul.addr %s158, 4
      %s160 = scalar_lea.vmem %s2, %s159
      %s161 = smul.u32 16, %s17
      %s162 = smul.u32 2, %s18
      %p163 = scmp.lt.s32.totalorder %s161, 31
      %s164 = scalar_select %p163, %s161, 31
      %p165 = scmp.lt.s32.totalorder %s162, 1
      %s166 = scalar_select %p165, %s162, 1
      %s167 = smul.addr %s164, 2
      %s168 = sadd.s32 %s166, %s167
      %s169 = smul.addr %s168, 4
      %s170 = scalar_lea.vmem %s0, %s169
      %s171 = smul.u32 16, %s17
      %s172 = smul.u32 2, %s18
      %s173 = smul.u32 16, %s17
      %p174 = scmp.lt.s32.totalorder %s173, 31
      %s175 = scalar_select %p174, %s173, 31
      %s176 = smul.addr %s175, 2
      %s177 = smul.addr %s176, 4
      %s178 = scalar_lea.vmem %s2, %s177
      %s179 = smul.u32 16, %s17
      %v180 = vld [vmem:[%s170] sm:$0xff]
      %v181 = vld [vmem:[%s170 + $0x8] sm:$0xff]
      %v182 = vld [vmem:[%s170 + $0x10] sm:$0xff]
      %v183 = vld [vmem:[%s170 + $0x18] sm:$0xff]
      %v184 = vld [vmem:[%s170 + $0x20] sm:$0xff]
      %v185 = vld [vmem:[%s170 + $0x28] sm:$0xff]
      %v186 = vld [vmem:[%s170 + $0x30] sm:$0xff]
      %v187 = vld [vmem:[%s170 + $0x38] sm:$0xff]
      %v188 = vld [vmem:[%s170 + $0x40] sm:$0xff]
      %v189 = vld [vmem:[%s170 + $0x48] sm:$0xff]
      %v190 = vld [vmem:[%s170 + $0x50] sm:$0xff]
      %v191 = vld [vmem:[%s170 + $0x58] sm:$0xff]
      %v192 = vld [vmem:[%s170 + $0x60] sm:$0xff]
      %v193 = vld [vmem:[%s170 + $0x68] sm:$0xff]
      %v194 = vld [vmem:[%s170 + $0x70] sm:$0xff]
      %v195 = vld [vmem:[%s170 + $0x78] sm:$0xff]
      %v196 = vld [vmem:[%s1] sm:$0xff]
      %v197 = vld [vmem:[%s1 + $0x8] sm:$0xff]
      %v198 = vld [vmem:[%s1 + $0x10] sm:$0xff]
      %v199 = vld [vmem:[%s1 + $0x18] sm:$0xff]
      %v200 = vld [vmem:[%s1 + $0x20] sm:$0xff]
      %v201 = vld [vmem:[%s1 + $0x28] sm:$0xff]
      %v202 = vld [vmem:[%s1 + $0x30] sm:$0xff]
      %v203 = vld [vmem:[%s1 + $0x38] sm:$0xff]
      %v204 = vld [vmem:[%s1 + $0x40] sm:$0xff]
      %v205 = vld [vmem:[%s1 + $0x48] sm:$0xff]
      %v206 = vld [vmem:[%s1 + $0x50] sm:$0xff]
      %v207 = vld [vmem:[%s1 + $0x58] sm:$0xff]
      %v208 = vld [vmem:[%s1 + $0x60] sm:$0xff]
      %v209 = vld [vmem:[%s1 + $0x68] sm:$0xff]
      %v210 = vld [vmem:[%s1 + $0x70] sm:$0xff]
      %v211 = vld [vmem:[%s1 + $0x78] sm:$0xff]
      %v212 = vld [vmem:[%s1 + $0x80] sm:$0xff]
      %v213 = vld [vmem:[%s1 + $0x88] sm:$0xff]
      %v214 = vld [vmem:[%s1 + $0x90] sm:$0xff]
      %v215 = vld [vmem:[%s1 + $0x98] sm:$0xff]
      %v216 = vld [vmem:[%s1 + $0xa0] sm:$0xff]
      %v217 = vld [vmem:[%s1 + $0xa8] sm:$0xff]
      %v218 = vld [vmem:[%s1 + $0xb0] sm:$0xff]
      %v219 = vld [vmem:[%s1 + $0xb8] sm:$0xff]
      %v220 = vld [vmem:[%s1 + $0xc0] sm:$0xff]
      %v221 = vld [vmem:[%s1 + $0xc8] sm:$0xff]
      %v222 = vld [vmem:[%s1 + $0xd0] sm:$0xff]
      %v223 = vld [vmem:[%s1 + $0xd8] sm:$0xff]
      %v224 = vld [vmem:[%s1 + $0xe0] sm:$0xff]
      %v225 = vld [vmem:[%s1 + $0xe8] sm:$0xff]
      %v226 = vld [vmem:[%s1 + $0xf0] sm:$0xff]
      %v227 = vld [vmem:[%s1 + $0xf8] sm:$0xff]
      %v244 = vunpack.c.l.b16 %v180
      %v245 = vunpack.c.h.b16 %v180
      %v246 = vunpack.c.l.b16 %v181
      %v247 = vunpack.c.h.b16 %v181
      %v248 = vunpack.c.l.b16 %v182
      %v249 = vunpack.c.h.b16 %v182
      %v250 = vunpack.c.l.b16 %v183
      %v251 = vunpack.c.h.b16 %v183
      %v252 = vunpack.c.l.b16 %v184
      %v253 = vunpack.c.h.b16 %v184
      %v254 = vunpack.c.l.b16 %v185
      %v255 = vunpack.c.h.b16 %v185
      %v256 = vunpack.c.l.b16 %v186
      %v257 = vunpack.c.h.b16 %v186
      %v258 = vunpack.c.l.b16 %v187
      %v259 = vunpack.c.h.b16 %v187
      %v260 = vunpack.c.l.b16 %v188
      %v261 = vunpack.c.h.b16 %v188
      %v262 = vunpack.c.l.b16 %v189
      %v263 = vunpack.c.h.b16 %v189
      %v264 = vunpack.c.l.b16 %v190
      %v265 = vunpack.c.h.b16 %v190
      %v266 = vunpack.c.l.b16 %v191
      %v267 = vunpack.c.h.b16 %v191
      %v268 = vunpack.c.l.b16 %v192
      %v269 = vunpack.c.h.b16 %v192
      %v270 = vunpack.c.l.b16 %v193
      %v271 = vunpack.c.h.b16 %v193
      %v272 = vunpack.c.l.b16 %v194
      %v273 = vunpack.c.h.b16 %v194
      %v274 = vunpack.c.l.b16 %v195
      %v275 = vunpack.c.h.b16 %v195
      %v276 = vpack.c.b16 %v246, %v244
      %v277 = vpack.c.b16 %v247, %v245
      %v278 = vpack.c.b16 %v250, %v248
      %v279 = vpack.c.b16 %v251, %v249
      %v280 = vpack.c.b16 %v254, %v252
      %v281 = vpack.c.b16 %v255, %v253
      %v282 = vpack.c.b16 %v258, %v256
      %v283 = vpack.c.b16 %v259, %v257
      %v284 = vpack.c.b16 %v262, %v260
      %v285 = vpack.c.b16 %v263, %v261
      %v286 = vpack.c.b16 %v266, %v264
      %v287 = vpack.c.b16 %v267, %v265
      %v288 = vpack.c.b16 %v270, %v268
      %v289 = vpack.c.b16 %v271, %v269
      %v290 = vpack.c.b16 %v274, %v272
      %v291 = vpack.c.b16 %v275, %v273
      %v340 = vunpack.c.l.b16 %v196
      %v341 = vunpack.c.h.b16 %v196
      %v342 = vunpack.c.l.b16 %v197
      %v343 = vunpack.c.h.b16 %v197
      %v344 = vunpack.c.l.b16 %v198
      %v345 = vunpack.c.h.b16 %v198
      %v346 = vunpack.c.l.b16 %v199
      %v347 = vunpack.c.h.b16 %v199
      %v348 = vunpack.c.l.b16 %v200
      %v349 = vunpack.c.h.b16 %v200
      %v350 = vunpack.c.l.b16 %v201
      %v351 = vunpack.c.h.b16 %v201
      %v352 = vunpack.c.l.b16 %v202
      %v353 = vunpack.c.h.b16 %v202
      %v354 = vunpack.c.l.b16 %v203
      %v355 = vunpack.c.h.b16 %v203
      %v356 = vunpack.c.l.b16 %v204
      %v357 = vunpack.c.h.b16 %v204
      %v358 = vunpack.c.l.b16 %v205
      %v359 = vunpack.c.h.b16 %v205
      %v360 = vunpack.c.l.b16 %v206
      %v361 = vunpack.c.h.b16 %v206
      %v362 = vunpack.c.l.b16 %v207
      %v363 = vunpack.c.h.b16 %v207
      %v364 = vunpack.c.l.b16 %v208
      %v365 = vunpack.c.h.b16 %v208
      %v366 = vunpack.c.l.b16 %v209
      %v367 = vunpack.c.h.b16 %v209
      %v368 = vunpack.c.l.b16 %v210
      %v369 = vunpack.c.h.b16 %v210
      %v370 = vunpack.c.l.b16 %v211
      %v371 = vunpack.c.h.b16 %v211
      %v372 = vunpack.c.l.b16 %v212
      %v373 = vunpack.c.h.b16 %v212
      %v374 = vunpack.c.l.b16 %v213
      %v375 = vunpack.c.h.b16 %v213
      %v376 = vunpack.c.l.b16 %v214
      %v377 = vunpack.c.h.b16 %v214
      %v378 = vunpack.c.l.b16 %v215
      %v379 = vunpack.c.h.b16 %v215
      %v380 = vunpack.c.l.b16 %v216
      %v381 = vunpack.c.h.b16 %v216
      %v382 = vunpack.c.l.b16 %v217
      %v383 = vunpack.c.h.b16 %v217
      %v384 = vunpack.c.l.b16 %v218
      %v385 = vunpack.c.h.b16 %v218
      %v386 = vunpack.c.l.b16 %v219
      %v387 = vunpack.c.h.b16 %v219
      %v388 = vunpack.c.l.b16 %v220
      %v389 = vunpack.c.h.b16 %v220
      %v390 = vunpack.c.l.b16 %v221
      %v391 = vunpack.c.h.b16 %v221
      %v392 = vunpack.c.l.b16 %v222
      %v393 = vunpack.c.h.b16 %v222
      %v394 = vunpack.c.l.b16 %v223
      %v395 = vunpack.c.h.b16 %v223
      %v396 = vunpack.c.l.b16 %v224
      %v397 = vunpack.c.h.b16 %v224
      %v398 = vunpack.c.l.b16 %v225
      %v399 = vunpack.c.h.b16 %v225
      %v400 = vunpack.c.l.b16 %v226
      %v401 = vunpack.c.h.b16 %v226
      %v402 = vunpack.c.l.b16 %v227
      %v403 = vunpack.c.h.b16 %v227
      %v404 = vpack.c.b16 %v342, %v340
      %v405 = vpack.c.b16 %v343, %v341
      %v406 = vpack.c.b16 %v346, %v344
      %v407 = vpack.c.b16 %v347, %v345
      %v408 = vpack.c.b16 %v350, %v348
      %v409 = vpack.c.b16 %v351, %v349
      %v410 = vpack.c.b16 %v354, %v352
      %v411 = vpack.c.b16 %v355, %v353
      %v412 = vpack.c.b16 %v358, %v356
      %v413 = vpack.c.b16 %v359, %v357
      %v414 = vpack.c.b16 %v362, %v360
      %v415 = vpack.c.b16 %v363, %v361
      %v416 = vpack.c.b16 %v366, %v364
      %v417 = vpack.c.b16 %v367, %v365
      %v418 = vpack.c.b16 %v370, %v368
      %v419 = vpack.c.b16 %v371, %v369
      %v420 = vpack.c.b16 %v374, %v372
      %v421 = vpack.c.b16 %v375, %v373
      %v422 = vpack.c.b16 %v378, %v376
      %v423 = vpack.c.b16 %v379, %v377
      %v424 = vpack.c.b16 %v382, %v380
      %v425 = vpack.c.b16 %v383, %v381
      %v426 = vpack.c.b16 %v386, %v384
      %v427 = vpack.c.b16 %v387, %v385
      %v428 = vpack.c.b16 %v390, %v388
      %v429 = vpack.c.b16 %v391, %v389
      %v430 = vpack.c.b16 %v394, %v392
      %v431 = vpack.c.b16 %v395, %v393
      %v432 = vpack.c.b16 %v398, %v396
      %v433 = vpack.c.b16 %v399, %v397
      %v434 = vpack.c.b16 %v402, %v400
      %v435 = vpack.c.b16 %v403, %v401
      %468 = vmatpush.bf16.msra.mxu0 %v418
      %469 = vmatpush.bf16.msra.mxu0 %v416
      %470 = vmatpush.bf16.msra.mxu0 %v414
      %471 = vmatpush.bf16.msra.mxu0 %v412
      %472 = vmatpush.bf16.msra.mxu0 %v410
      %473 = vmatpush.bf16.msra.mxu0 %v408
      %474 = vmatpush.bf16.msra.mxu0 %v406
      %475 = vmatpush.bf16.msra.mxu0 %v404
      %476 = vmatmul.bf16.gmra.mxu0 %v276
      %v477 = vpop.f32.mrf.mxu0
      %v478 = vadd.f32 0.0, %v477
      %v479 = vpop.f32.mrf.mxu0
      %v480 = vadd.f32 0.0, %v479
      %481 = vmatmul.bf16.gmra.mxu0 %v278
      %v482 = vpop.f32.mrf.mxu0
      %v483 = vadd.f32 0.0, %v482
      %v484 = vpop.f32.mrf.mxu0
      %v485 = vadd.f32 0.0, %v484
      %486 = vmatmul.bf16.gmra.mxu0 %v280
      %v487 = vpop.f32.mrf.mxu0
      %v488 = vadd.f32 0.0, %v487
      %v489 = vpop.f32.mrf.mxu0
      %v490 = vadd.f32 0.0, %v489
      %491 = vmatmul.bf16.gmra.mxu0 %v282
      %v492 = vpop.f32.mrf.mxu0
      %v493 = vadd.f32 0.0, %v492
      %v494 = vpop.f32.mrf.mxu0
      %v495 = vadd.f32 0.0, %v494
      %496 = vmatmul.bf16.gmra.mxu0 %v284
      %v497 = vpop.f32.mrf.mxu0
      %v498 = vadd.f32 0.0, %v497
      %v499 = vpop.f32.mrf.mxu0
      %v500 = vadd.f32 0.0, %v499
      %501 = vmatmul.bf16.gmra.mxu0 %v286
      %v502 = vpop.f32.mrf.mxu0
      %v503 = vadd.f32 0.0, %v502
      %v504 = vpop.f32.mrf.mxu0
      %v505 = vadd.f32 0.0, %v504
      %506 = vmatmul.bf16.gmra.mxu0 %v288
      %v507 = vpop.f32.mrf.mxu0
      %v508 = vadd.f32 0.0, %v507
      %v509 = vpop.f32.mrf.mxu0
      %v510 = vadd.f32 0.0, %v509
      %511 = vmatmul.bf16.gmra.mxu0 %v290
      %v512 = vpop.f32.mrf.mxu0
      %v513 = vadd.f32 0.0, %v512
      %v514 = vpop.f32.mrf.mxu0
      %v515 = vadd.f32 0.0, %v514
      %516 = vdwg.mxu0
      %517 = vmatpush.bf16.msra.mxu0 %v434
      %518 = vmatpush.bf16.msra.mxu0 %v432
      %519 = vmatpush.bf16.msra.mxu0 %v430
      %520 = vmatpush.bf16.msra.mxu0 %v428
      %521 = vmatpush.bf16.msra.mxu0 %v426
      %522 = vmatpush.bf16.msra.mxu0 %v424
      %523 = vmatpush.bf16.msra.mxu0 %v422
      %524 = vmatpush.bf16.msra.mxu0 %v420
      %525 = vmatmul.bf16.gmra.mxu0 %v277
      %v526 = vpop.f32.mrf.mxu0
      %v527 = vadd.f32 %v478, %v526
      %v528 = vpop.f32.mrf.mxu0
      %v529 = vadd.f32 %v480, %v528
      %530 = vmatmul.bf16.gmra.mxu0 %v279
      %v531 = vpop.f32.mrf.mxu0
      %v532 = vadd.f32 %v483, %v531
      %v533 = vpop.f32.mrf.mxu0
      %v534 = vadd.f32 %v485, %v533
      %535 = vmatmul.bf16.gmra.mxu0 %v281
      %v536 = vpop.f32.mrf.mxu0
      %v537 = vadd.f32 %v488, %v536
      %v538 = vpop.f32.mrf.mxu0
      %v539 = vadd.f32 %v490, %v538
      %540 = vmatmul.bf16.gmra.mxu0 %v283
      %v541 = vpop.f32.mrf.mxu0
      %v542 = vadd.f32 %v493, %v541
      %v543 = vpop.f32.mrf.mxu0
      %v544 = vadd.f32 %v495, %v543
      %545 = vmatmul.bf16.gmra.mxu0 %v285
      %v546 = vpop.f32.mrf.mxu0
      %v547 = vadd.f32 %v498, %v546
      %v548 = vpop.f32.mrf.mxu0
      %v549 = vadd.f32 %v500, %v548
      %550 = vmatmul.bf16.gmra.mxu0 %v287
      %v551 = vpop.f32.mrf.mxu0
      %v552 = vadd.f32 %v503, %v551
      %v553 = vpop.f32.mrf.mxu0
      %v554 = vadd.f32 %v505, %v553
      %555 = vmatmul.bf16.gmra.mxu0 %v289
      %v556 = vpop.f32.mrf.mxu0
      %v557 = vadd.f32 %v508, %v556
      %v558 = vpop.f32.mrf.mxu0
      %v559 = vadd.f32 %v510, %v558
      %560 = vmatmul.bf16.gmra.mxu0 %v291
      %v561 = vpop.f32.mrf.mxu0
      %v562 = vadd.f32 %v513, %v561
      %v563 = vpop.f32.mrf.mxu0
      %v564 = vadd.f32 %v515, %v563
      %565 = vdwg.mxu0
      %566 = vmatpush.bf16.msra.mxu0 %v419
      %567 = vmatpush.bf16.msra.mxu0 %v417
      %568 = vmatpush.bf16.msra.mxu0 %v415
      %569 = vmatpush.bf16.msra.mxu0 %v413
      %570 = vmatpush.bf16.msra.mxu0 %v411
      %571 = vmatpush.bf16.msra.mxu0 %v409
      %572 = vmatpush.bf16.msra.mxu0 %v407
      %573 = vmatpush.bf16.msra.mxu0 %v405
      %574 = vmatmul.bf16.gmra.mxu0 %v276
      %v575 = vpop.f32.mrf.mxu0
      %v576 = vadd.f32 0.0, %v575
      %v577 = vpop.f32.mrf.mxu0
      %v578 = vadd.f32 0.0, %v577
      %579 = vmatmul.bf16.gmra.mxu0 %v278
      %v580 = vpop.f32.mrf.mxu0
      %v581 = vadd.f32 0.0, %v580
      %v582 = vpop.f32.mrf.mxu0
      %v583 = vadd.f32 0.0, %v582
      %584 = vmatmul.bf16.gmra.mxu0 %v280
      %v585 = vpop.f32.mrf.mxu0
      %v586 = vadd.f32 0.0, %v585
      %v587 = vpop.f32.mrf.mxu0
      %v588 = vadd.f32 0.0, %v587
      %589 = vmatmul.bf16.gmra.mxu0 %v282
      %v590 = vpop.f32.mrf.mxu0
      %v591 = vadd.f32 0.0, %v590
      %v592 = vpop.f32.mrf.mxu0
      %v593 = vadd.f32 0.0, %v592
      %594 = vmatmul.bf16.gmra.mxu0 %v284
      %v595 = vpop.f32.mrf.mxu0
      %v596 = vadd.f32 0.0, %v595
      %v597 = vpop.f32.mrf.mxu0
      %v598 = vadd.f32 0.0, %v597
      %599 = vmatmul.bf16.gmra.mxu0 %v286
      %v600 = vpop.f32.mrf.mxu0
      %v601 = vadd.f32 0.0, %v600
      %v602 = vpop.f32.mrf.mxu0
      %v603 = vadd.f32 0.0, %v602
      %604 = vmatmul.bf16.gmra.mxu0 %v288
      %v605 = vpop.f32.mrf.mxu0
      %v606 = vadd.f32 0.0, %v605
      %v607 = vpop.f32.mrf.mxu0
      %v608 = vadd.f32 0.0, %v607
      %609 = vmatmul.bf16.gmra.mxu0 %v290
      %v610 = vpop.f32.mrf.mxu0
      %v611 = vadd.f32 0.0, %v610
      %v612 = vpop.f32.mrf.mxu0
      %v613 = vadd.f32 0.0, %v612
      %614 = vdwg.mxu0
      %615 = vmatpush.bf16.msra.mxu0 %v435
      %616 = vmatpush.bf16.msra.mxu0 %v433
      %617 = vmatpush.bf16.msra.mxu0 %v431
      %618 = vmatpush.bf16.msra.mxu0 %v429
      %619 = vmatpush.bf16.msra.mxu0 %v427
      %620 = vmatpush.bf16.msra.mxu0 %v425
      %621 = vmatpush.bf16.msra.mxu0 %v423
      %622 = vmatpush.bf16.msra.mxu0 %v421
      %623 = vmatmul.bf16.gmra.mxu0 %v277
      %v624 = vpop.f32.mrf.mxu0
      %v625 = vadd.f32 %v576, %v624
      %v626 = vpop.f32.mrf.mxu0
      %v627 = vadd.f32 %v578, %v626
      %628 = vmatmul.bf16.gmra.mxu0 %v279
      %v629 = vpop.f32.mrf.mxu0
      %v630 = vadd.f32 %v581, %v629
      %v631 = vpop.f32.mrf.mxu0
      %v632 = vadd.f32 %v583, %v631
      %633 = vmatmul.bf16.gmra.mxu0 %v281
      %v634 = vpop.f32.mrf.mxu0
      %v635 = vadd.f32 %v586, %v634
      %v636 = vpop.f32.mrf.mxu0
      %v637 = vadd.f32 %v588, %v636
      %638 = vmatmul.bf16.gmra.mxu0 %v283
      %v639 = vpop.f32.mrf.mxu0
      %v640 = vadd.f32 %v591, %v639
      %v641 = vpop.f32.mrf.mxu0
      %v642 = vadd.f32 %v593, %v641
      %643 = vmatmul.bf16.gmra.mxu0 %v285
      %v644 = vpop.f32.mrf.mxu0
      %v645 = vadd.f32 %v596, %v644
      %v646 = vpop.f32.mrf.mxu0
      %v647 = vadd.f32 %v598, %v646
      %648 = vmatmul.bf16.gmra.mxu0 %v287
      %v649 = vpop.f32.mrf.mxu0
      %v650 = vadd.f32 %v601, %v649
      %v651 = vpop.f32.mrf.mxu0
      %v652 = vadd.f32 %v603, %v651
      %653 = vmatmul.bf16.gmra.mxu0 %v289
      %v654 = vpop.f32.mrf.mxu0
      %v655 = vadd.f32 %v606, %v654
      %v656 = vpop.f32.mrf.mxu0
      %v657 = vadd.f32 %v608, %v656
      %658 = vmatmul.bf16.gmra.mxu0 %v291
      %v659 = vpop.f32.mrf.mxu0
      %v660 = vadd.f32 %v611, %v659
      %v661 = vpop.f32.mrf.mxu0
      %v662 = vadd.f32 %v613, %v661
      %663 = vdwg.mxu0
      %v664 = vpack.c.bf16 %v625, %v527
      %v665 = vpack.c.bf16 %v627, %v529
      %v666 = vpack.c.bf16 %v630, %v532
      %v667 = vpack.c.bf16 %v632, %v534
      %v668 = vpack.c.bf16 %v635, %v537
      %v669 = vpack.c.bf16 %v637, %v539
      %v670 = vpack.c.bf16 %v640, %v542
      %v671 = vpack.c.bf16 %v642, %v544
      %v672 = vpack.c.bf16 %v645, %v547
      %v673 = vpack.c.bf16 %v647, %v549
      %v674 = vpack.c.bf16 %v650, %v552
      %v675 = vpack.c.bf16 %v652, %v554
      %v676 = vpack.c.bf16 %v655, %v557
      %v677 = vpack.c.bf16 %v657, %v559
      %v678 = vpack.c.bf16 %v660, %v562
      %v679 = vpack.c.bf16 %v662, %v564
      %680 = vst [vmem:[%s178] sm:$0xff] %v664
      %681 = vst [vmem:[%s178 + $0x8] sm:$0xff] %v665
      %682 = vst [vmem:[%s178 + $0x10] sm:$0xff] %v666
      %683 = vst [vmem:[%s178 + $0x18] sm:$0xff] %v667
      %684 = vst [vmem:[%s178 + $0x20] sm:$0xff] %v668
      %685 = vst [vmem:[%s178 + $0x28] sm:$0xff] %v669
      %686 = vst [vmem:[%s178 + $0x30] sm:$0xff] %v670
      %687 = vst [vmem:[%s178 + $0x38] sm:$0xff] %v671
      %688 = vst [vmem:[%s178 + $0x40] sm:$0xff] %v672
      %689 = vst [vmem:[%s178 + $0x48] sm:$0xff] %v673
      %690 = vst [vmem:[%s178 + $0x50] sm:$0xff] %v674
      %691 = vst [vmem:[%s178 + $0x58] sm:$0xff] %v675
      %692 = vst [vmem:[%s178 + $0x60] sm:$0xff] %v676
      %693 = vst [vmem:[%s178 + $0x68] sm:$0xff] %v677
      %694 = vst [vmem:[%s178 + $0x70] sm:$0xff] %v678
      %695 = vst [vmem:[%s178 + $0x78] sm:$0xff] %v679
      %s696 = smul.u32 16, %s17
      %p697 = scmp.lt.s32.totalorder %s696, 31
      %s698 = scalar_select %p697, %s696, 31
      %s699 = smul.addr %s698, 2
      %s700 = smul.addr %s699, 4
      %s701 = scalar_lea.vmem %s2, %s700
      // Predicated region
      $region29: #{batch_vgae_forward.3} parent=27 // pred_check
        %p702 = pneg %p92
      $region30: #{batch_vgae_forward.3} parent=27 // pred_check_branch
        %704 = sbr.rel (%p702) target = $region32
      $region31: #{batch_vgae_forward.3} parent=27 // pred_region
        %s705 = smul.u32 16, %s17
      $region32: #{batch_vgae_forward.3} parent=27 // pred_fallthru
        _
    $region28: #{batch_vgae_forward.3} parent=5 // pred_fallthru
      _
    %p706 = scmp.le.s32.totalorder 2, %s8
    // Predicated region
    $region33: #{batch_vgae_forward.3} parent=5 // pred_check
      %p707 = pneg %p706
    $region34: #{batch_vgae_forward.3} parent=5 // pred_check_branch
      %709 = sbr.rel (%p707) target = $region36
    $region35: #{batch_vgae_forward.3} parent=5 // pred_region
      %s710 = ssub.s32 %s8, 2
      // Predicated region
      $region37: #{batch_vgae_forward.3} parent=35 // pred_check
        %p711 = pneg %p98
      $region38: #{batch_vgae_forward.3} parent=35 // pred_check_branch
        %713 = sbr.rel (%p711) target = $region40
      $region39: #{batch_vgae_forward.3} parent=35 // pred_region
        %s714 = smul.u32 16, %s19
        %p715 = scmp.lt.s32.totalorder %s714, 31
        %s716 = scalar_select %p715, %s714, 31
        %s717 = smul.addr %s716, 2
        %s718 = smul.addr %s717, 4
        %s719 = scalar_lea.vmem %s2, %s718
      $region40: #{batch_vgae_forward.3} parent=35 // pred_fallthru
        _
    $region36: #{batch_vgae_forward.3} parent=5 // pred_fallthru
      _
  $region6: #{batch_vgae_forward.3} parent=0 // loop_footer
    %s12 = sadd.s32 1, %s8
  $region7: #{batch_vgae_forward.3} parent=0 // loop_footer_branch
    %7 = sbr.rel target = $region3
  $region8: #{batch_vgae_forward.3} parent=0 // loop_exit
    _

// kernel: batch_vgae_forward.4
$region0: #{batch_vgae_forward.4}
  #allocation0 [shape = 'u32[]', space=smem, size = 0x4, offset = 0x4, fixed_abs, tag = 'smem constant byte address 0x4 - core index']
  #allocation1 [shape = 'u32[72,128]{1,0:T(1,128)}', space=vmem, size = 0x9000, scoped, tag = 'internal scratch']
  %s0 = inlined_call_operand.vmem [shape: bf16[256,256], index: 0, kind: input, shape index: {}]
  %s1 = inlined_call_operand.vmem [shape: bf16[256,256], index: 1, kind: input, shape index: {}]
  %s2 = inlined_call_operand.vmem [shape: bf16[256,256], index: 2, kind: input, shape index: {}]
  %s3 = inlined_call_operand.vmem [shape: bf16[256,256], index: 3, kind: output, shape index: {}]
  %s4 = sld [smem:[#allocation0]]
  $region45: #{batch_vgae_forward.4} parent=0
    _
  %s6 = ssub.s32 1, %s4
  %s7 = scalar_select 0, %s6, %s4
  loop: start=0, step=1, limit=4
  $region2: #{batch_vgae_forward.4} parent=0 // loop_pre_header
    _
  $region3: #{batch_vgae_forward.4} parent=0 // loop_header
    %s9 = sphi 0, %s13
    %p10 = scmp.ge.s32.totalorder %s9, 4
    %s16 = sphi 0, %s28
    %s17 = sphi 0, %s24
    %s18 = sphi 0, %s16
    %s19 = sphi 0, %s17
    %s20 = sphi 0, %s18
    %s21 = sphi 0, %s19
    %s33 = sphi 0, %s35
    %s36 = sphi 0, %s33
    %s37 = sphi 0, %s36
    %s53 = sphi 0, %s37
    %s57 = sphi 0, %s57
    %s59 = sphi 0, %s57
    %s60 = sphi 0, %s59
    %s74 = sphi 0, %s60
    %s78 = sphi 0, %s78
    %s80 = sphi 0, %s78
    %s81 = sphi 0, %s80
    %s95 = sphi 0, %s81
    %s101 = sphi 0, %s103
    %s104 = sphi 0, %s101
    %s105 = sphi 0, %s104
    %s121 = sphi 0, %s105
  $region4: #{batch_vgae_forward.4} parent=0 // loop_header_branch
    %12 = sbr.rel (%p10) target = $region8
  $region5: #{batch_vgae_forward.4} parent=0 // loop_body
    %s14 = ssub.s32 %s9, 1
    %s15 = ssub.s32 %s9, 2
    %s22 = sadd.s32 1, %s17
    %p23 = scmp.ge.s32.totalorder %s22, 1
    %s24 = scalar_select %p23, 0, %s22
    %s25 = sadd.s32 1, %s16
    %s26 = scalar_select %p23, %s25, %s16
    %p27 = scmp.ge.s32.totalorder %s26, 2
    %s28 = scalar_select %p27, 0, %s26
    %s29 = ssub.s32 %s16, %s28
    %s30 = ssub.s32 %s17, %s24
    %s31 = sor.u32 %s29, %s30
    %p32 = scmp.eq.s32.totalorder %s31, 0
    %s34 = sadd.s32 %s33, 1
    %s35 = scalar_select %p32, %s33, %s34
    %p38 = pneg %p32
    %p39 = scmp.eq.s32.totalorder %s9, 1
    %p40 = por %p38, %p39
    %p41 = scmp.ne.s32.totalorder %s33, %s36
    %p42 = scmp.eq.s32.totalorder %s9, 0
    %p43 = por %p41, %p42
    %p44 = scmp.ne.s32.totalorder %s33, %s36
    %p45 = scmp.eq.s32.totalorder %s14, 1
    %p46 = por %p44, %p45
    %p47 = scmp.ne.s32.totalorder %s36, %s37
    %p48 = scmp.eq.s32.totalorder %s14, 0
    %p49 = por %p47, %p48
    %p50 = scmp.ne.s32.totalorder %s36, %s37
    %p51 = scmp.eq.s32.totalorder %s15, 1
    %p52 = por %p50, %p51
    %p54 = scmp.ne.s32.totalorder %s37, %s53
    %p55 = scmp.eq.s32.totalorder %s15, 0
    %p56 = por %p54, %p55
    %s58 = sadd.s32 %s57, 1
    %p61 = scmp.eq.s32.totalorder %s9, 1
    %p62 = scmp.ne.s32.totalorder %s57, %s59
    %p63 = scmp.eq.s32.totalorder %s9, 0
    %p64 = por %p62, %p63
    %p65 = scmp.ne.s32.totalorder %s57, %s59
    %p66 = scmp.eq.s32.totalorder %s14, 1
    %p67 = por %p65, %p66
    %p68 = scmp.ne.s32.totalorder %s59, %s60
    %p69 = scmp.eq.s32.totalorder %s14, 0
    %p70 = por %p68, %p69
    %p71 = scmp.ne.s32.totalorder %s59, %s60
    %p72 = scmp.eq.s32.totalorder %s15, 1
    %p73 = por %p71, %p72
    %p75 = scmp.ne.s32.totalorder %s60, %s74
    %p76 = scmp.eq.s32.totalorder %s15, 0
    %p77 = por %p75, %p76
    %s79 = sadd.s32 %s78, 1
    %p82 = scmp.eq.s32.totalorder %s9, 1
    %p83 = scmp.ne.s32.totalorder %s78, %s80
    %p84 = scmp.eq.s32.totalorder %s9, 0
    %p85 = por %p83, %p84
    %p86 = scmp.ne.s32.totalorder %s78, %s80
    %p87 = scmp.eq.s32.totalorder %s14, 1
    %p88 = por %p86, %p87
    %p89 = scmp.ne.s32.totalorder %s80, %s81
    %p90 = scmp.eq.s32.totalorder %s14, 0
    %p91 = por %p89, %p90
    %p92 = scmp.ne.s32.totalorder %s80, %s81
    %p93 = scmp.eq.s32.totalorder %s15, 1
    %p94 = por %p92, %p93
    %p96 = scmp.ne.s32.totalorder %s81, %s95
    %p97 = scmp.eq.s32.totalorder %s15, 0
    %p98 = por %p96, %p97
    %s99 = ssub.s32 %s16, %s28
    %p100 = scmp.eq.s32.totalorder %s99, 0
    %s102 = sadd.s32 %s101, 1
    %s103 = scalar_select %p100, %s101, %s102
    %p106 = pneg %p100
    %p107 = scmp.eq.s32.totalorder %s9, 1
    %p108 = por %p106, %p107
    %p109 = scmp.ne.s32.totalorder %s101, %s104
    %p110 = scmp.eq.s32.totalorder %s9, 0
    %p111 = por %p109, %p110
    %p112 = scmp.ne.s32.totalorder %s101, %s104
    %p113 = scmp.eq.s32.totalorder %s14, 1
    %p114 = por %p112, %p113
    %p115 = scmp.ne.s32.totalorder %s104, %s105
    %p116 = scmp.eq.s32.totalorder %s14, 0
    %p117 = por %p115, %p116
    %p118 = scmp.ne.s32.totalorder %s104, %s105
    %p119 = scmp.eq.s32.totalorder %s15, 1
    %p120 = por %p118, %p119
    %p122 = scmp.ne.s32.totalorder %s105, %s121
    %p123 = scmp.eq.s32.totalorder %s15, 0
    %p124 = por %p122, %p123
    %p125 = scmp.le.s32.totalorder 1, %s9
    %p126 = scmp.lt.s32.totalorder %s9, 3
    %p127 = pnand %p125, %p126
    %p128 = pneg %p127
    // Predicated region
    $region9: #{batch_vgae_forward.4} parent=5 // pred_check
      _
    $region10: #{batch_vgae_forward.4} parent=5 // pred_check_branch
      %130 = sbr.rel (%p127) target = $region12
    $region11: #{batch_vgae_forward.4} parent=5 // pred_region
      %s131 = ssub.s32 %s9, 1
      // Predicated region
      $region13: #{batch_vgae_forward.4} parent=11 // pred_check
        %p132 = pneg %p70
      $region14: #{batch_vgae_forward.4} parent=11 // pred_check_branch
        %134 = sbr.rel (%p132) target = $region16
      $region15: #{batch_vgae_forward.4} parent=11 // pred_region
        _
      $region16: #{batch_vgae_forward.4} parent=11 // pred_fallthru
        _
      // Predicated region
      $region17: #{batch_vgae_forward.4} parent=11 // pred_check
        %p135 = pneg %p91
      $region18: #{batch_vgae_forward.4} parent=11 // pred_check_branch
        %137 = sbr.rel (%p135) target = $region20
      $region19: #{batch_vgae_forward.4} parent=11 // pred_region
        _
      $region20: #{batch_vgae_forward.4} parent=11 // pred_fallthru
        _
    $region12: #{batch_vgae_forward.4} parent=5 // pred_fallthru
      _
    %p138 = scmp.lt.s32.totalorder %s9, 2
    // Predicated region
    $region21: #{batch_vgae_forward.4} parent=5 // pred_check
      %p139 = pneg %p138
    $region22: #{batch_vgae_forward.4} parent=5 // pred_check_branch
      %141 = sbr.rel (%p139) target = $region24
    $region23: #{batch_vgae_forward.4} parent=5 // pred_region
      // Predicated region
      $region25: #{batch_vgae_forward.4} parent=23 // pred_check
        %p142 = pneg %p43
      $region26: #{batch_vgae_forward.4} parent=23 // pred_check_branch
        %144 = sbr.rel (%p142) target = $region28
      $region27: #{batch_vgae_forward.4} parent=23 // pred_region
        %s145 = smul.u32 16, %s16
        %s146 = smul.u32 2, %s17
        %p147 = scmp.lt.s32.totalorder %s145, 31
        %s148 = scalar_select %p147, %s145, 31
        %p149 = scmp.lt.s32.totalorder %s146, 1
        %s150 = scalar_select %p149, %s146, 1
        %s151 = smul.addr %s148, 2
        %s152 = sadd.s32 %s150, %s151
        %s153 = smul.addr %s152, 4
        %s154 = scalar_lea.vmem %s0, %s153
        %s155 = smul.u32 16, %s16
        %s156 = smul.u32 2, %s17
      $region28: #{batch_vgae_forward.4} parent=23 // pred_fallthru
        _
    $region24: #{batch_vgae_forward.4} parent=5 // pred_fallthru
      _
    %p157 = scmp.le.s32.totalorder 1, %s9
    %p158 = scmp.lt.s32.totalorder %s9, 3
    %p159 = pnand %p157, %p158
    %p160 = pneg %p159
    // Predicated region
    $region29: #{batch_vgae_forward.4} parent=5 // pred_check
      _
    $region30: #{batch_vgae_forward.4} parent=5 // pred_check_branch
      %162 = sbr.rel (%p159) target = $region32
    $region31: #{batch_vgae_forward.4} parent=5 // pred_region
      %s163 = ssub.s32 %s9, 1
      %s164 = smul.u32 16, %s18
      %s165 = smul.u32 2, %s19
      %p166 = scmp.lt.s32.totalorder %s164, 31
      %s167 = scalar_select %p166, %s164, 31
      %p168 = scmp.lt.s32.totalorder %s165, 1
      %s169 = scalar_select %p168, %s165, 1
      %s170 = smul.addr %s167, 2
      %s171 = sadd.s32 %s169, %s170
      %s172 = smul.addr %s171, 4
      %s173 = scalar_lea.vmem %s0, %s172
      %p174 = pneg %p49
      %p175 = pneg %p46
      %p176 = pneg %p70
      %p177 = pneg %p67
      %p178 = pneg %p91
      %p179 = pneg %p88
      %p180 = pneg %p117
      %p181 = pneg %p114
      %s182 = smul.u32 16, %s18
      %p183 = scmp.lt.s32.totalorder %s182, 31
      %s184 = scalar_select %p183, %s182, 31
      %s185 = smul.addr %s184, 2
      %s186 = smul.addr %s185, 4
      %s187 = scalar_lea.vmem %s3, %s186
      %s188 = smul.u32 16, %s18
      %s189 = smul.u32 2, %s19
      %p190 = scmp.lt.s32.totalorder %s188, 31
      %s191 = scalar_select %p190, %s188, 31
      %p192 = scmp.lt.s32.totalorder %s189, 1
      %s193 = scalar_select %p192, %s189, 1
      %s194 = smul.addr %s191, 2
      %s195 = sadd.s32 %s193, %s194
      %s196 = smul.addr %s195, 4
      %s197 = scalar_lea.vmem %s0, %s196
      %s198 = smul.u32 16, %s18
      %s199 = smul.u32 2, %s19
      %s200 = smul.u32 16, %s18
      %p201 = scmp.lt.s32.totalorder %s200, 31
      %s202 = scalar_select %p201, %s200, 31
      %s203 = smul.addr %s202, 2
      %s204 = smul.addr %s203, 4
      %s205 = scalar_lea.vmem %s3, %s204
      %s206 = smul.u32 16, %s18
      %v207 = vld [vmem:[%s197] sm:$0xff]
      %v208 = vld [vmem:[%s197 + $0x8] sm:$0xff]
      %v209 = vld [vmem:[%s197 + $0x10] sm:$0xff]
      %v210 = vld [vmem:[%s197 + $0x18] sm:$0xff]
      %v211 = vld [vmem:[%s197 + $0x20] sm:$0xff]
      %v212 = vld [vmem:[%s197 + $0x28] sm:$0xff]
      %v213 = vld [vmem:[%s197 + $0x30] sm:$0xff]
      %v214 = vld [vmem:[%s197 + $0x38] sm:$0xff]
      %v215 = vld [vmem:[%s197 + $0x40] sm:$0xff]
      %v216 = vld [vmem:[%s197 + $0x48] sm:$0xff]
      %v217 = vld [vmem:[%s197 + $0x50] sm:$0xff]
      %v218 = vld [vmem:[%s197 + $0x58] sm:$0xff]
      %v219 = vld [vmem:[%s197 + $0x60] sm:$0xff]
      %v220 = vld [vmem:[%s197 + $0x68] sm:$0xff]
      %v221 = vld [vmem:[%s197 + $0x70] sm:$0xff]
      %v222 = vld [vmem:[%s197 + $0x78] sm:$0xff]
      %v223 = vld [vmem:[%s1] sm:$0xff]
      %v224 = vld [vmem:[%s1 + $0x8] sm:$0xff]
      %v225 = vld [vmem:[%s1 + $0x10] sm:$0xff]
      %v226 = vld [vmem:[%s1 + $0x18] sm:$0xff]
      %v227 = vld [vmem:[%s1 + $0x20] sm:$0xff]
      %v228 = vld [vmem:[%s1 + $0x28] sm:$0xff]
      %v229 = vld [vmem:[%s1 + $0x30] sm:$0xff]
      %v230 = vld [vmem:[%s1 + $0x38] sm:$0xff]
      %v231 = vld [vmem:[%s1 + $0x40] sm:$0xff]
      %v232 = vld [vmem:[%s1 + $0x48] sm:$0xff]
      %v233 = vld [vmem:[%s1 + $0x50] sm:$0xff]
      %v234 = vld [vmem:[%s1 + $0x58] sm:$0xff]
      %v235 = vld [vmem:[%s1 + $0x60] sm:$0xff]
      %v236 = vld [vmem:[%s1 + $0x68] sm:$0xff]
      %v237 = vld [vmem:[%s1 + $0x70] sm:$0xff]
      %v238 = vld [vmem:[%s1 + $0x78] sm:$0xff]
      %v239 = vld [vmem:[%s1 + $0x80] sm:$0xff]
      %v240 = vld [vmem:[%s1 + $0x88] sm:$0xff]
      %v241 = vld [vmem:[%s1 + $0x90] sm:$0xff]
      %v242 = vld [vmem:[%s1 + $0x98] sm:$0xff]
      %v243 = vld [vmem:[%s1 + $0xa0] sm:$0xff]
      %v244 = vld [vmem:[%s1 + $0xa8] sm:$0xff]
      %v245 = vld [vmem:[%s1 + $0xb0] sm:$0xff]
      %v246 = vld [vmem:[%s1 + $0xb8] sm:$0xff]
      %v247 = vld [vmem:[%s1 + $0xc0] sm:$0xff]
      %v248 = vld [vmem:[%s1 + $0xc8] sm:$0xff]
      %v249 = vld [vmem:[%s1 + $0xd0] sm:$0xff]
      %v250 = vld [vmem:[%s1 + $0xd8] sm:$0xff]
      %v251 = vld [vmem:[%s1 + $0xe0] sm:$0xff]
      %v252 = vld [vmem:[%s1 + $0xe8] sm:$0xff]
      %v253 = vld [vmem:[%s1 + $0xf0] sm:$0xff]
      %v254 = vld [vmem:[%s1 + $0xf8] sm:$0xff]
      %v271 = vunpack.c.l.b16 %v207
      %v272 = vunpack.c.h.b16 %v207
      %v273 = vunpack.c.l.b16 %v208
      %v274 = vunpack.c.h.b16 %v208
      %v275 = vunpack.c.l.b16 %v209
      %v276 = vunpack.c.h.b16 %v209
      %v277 = vunpack.c.l.b16 %v210
      %v278 = vunpack.c.h.b16 %v210
      %v279 = vunpack.c.l.b16 %v211
      %v280 = vunpack.c.h.b16 %v211
      %v281 = vunpack.c.l.b16 %v212
      %v282 = vunpack.c.h.b16 %v212
      %v283 = vunpack.c.l.b16 %v213
      %v284 = vunpack.c.h.b16 %v213
      %v285 = vunpack.c.l.b16 %v214
      %v286 = vunpack.c.h.b16 %v214
      %v287 = vunpack.c.l.b16 %v215
      %v288 = vunpack.c.h.b16 %v215
      %v289 = vunpack.c.l.b16 %v216
      %v290 = vunpack.c.h.b16 %v216
      %v291 = vunpack.c.l.b16 %v217
      %v292 = vunpack.c.h.b16 %v217
      %v293 = vunpack.c.l.b16 %v218
      %v294 = vunpack.c.h.b16 %v218
      %v295 = vunpack.c.l.b16 %v219
      %v296 = vunpack.c.h.b16 %v219
      %v297 = vunpack.c.l.b16 %v220
      %v298 = vunpack.c.h.b16 %v220
      %v299 = vunpack.c.l.b16 %v221
      %v300 = vunpack.c.h.b16 %v221
      %v301 = vunpack.c.l.b16 %v222
      %v302 = vunpack.c.h.b16 %v222
      %v303 = vpack.c.b16 %v273, %v271
      %v304 = vpack.c.b16 %v274, %v272
      %v305 = vpack.c.b16 %v277, %v275
      %v306 = vpack.c.b16 %v278, %v276
      %v307 = vpack.c.b16 %v281, %v279
      %v308 = vpack.c.b16 %v282, %v280
      %v309 = vpack.c.b16 %v285, %v283
      %v310 = vpack.c.b16 %v286, %v284
      %v311 = vpack.c.b16 %v289, %v287
      %v312 = vpack.c.b16 %v290, %v288
      %v313 = vpack.c.b16 %v293, %v291
      %v314 = vpack.c.b16 %v294, %v292
      %v315 = vpack.c.b16 %v297, %v295
      %v316 = vpack.c.b16 %v298, %v296
      %v317 = vpack.c.b16 %v301, %v299
      %v318 = vpack.c.b16 %v302, %v300
      %v367 = vunpack.c.l.b16 %v223
      %v368 = vunpack.c.h.b16 %v223
      %v369 = vunpack.c.l.b16 %v224
      %v370 = vunpack.c.h.b16 %v224
      %v371 = vunpack.c.l.b16 %v225
      %v372 = vunpack.c.h.b16 %v225
      %v373 = vunpack.c.l.b16 %v226
      %v374 = vunpack.c.h.b16 %v226
      %v375 = vunpack.c.l.b16 %v227
      %v376 = vunpack.c.h.b16 %v227
      %v377 = vunpack.c.l.b16 %v228
      %v378 = vunpack.c.h.b16 %v228
      %v379 = vunpack.c.l.b16 %v229
      %v380 = vunpack.c.h.b16 %v229
      %v381 = vunpack.c.l.b16 %v230
      %v382 = vunpack.c.h.b16 %v230
      %v383 = vunpack.c.l.b16 %v231
      %v384 = vunpack.c.h.b16 %v231
      %v385 = vunpack.c.l.b16 %v232
      %v386 = vunpack.c.h.b16 %v232
      %v387 = vunpack.c.l.b16 %v233
      %v388 = vunpack.c.h.b16 %v233
      %v389 = vunpack.c.l.b16 %v234
      %v390 = vunpack.c.h.b16 %v234
      %v391 = vunpack.c.l.b16 %v235
      %v392 = vunpack.c.h.b16 %v235
      %v393 = vunpack.c.l.b16 %v236
      %v394 = vunpack.c.h.b16 %v236
      %v395 = vunpack.c.l.b16 %v237
      %v396 = vunpack.c.h.b16 %v237
      %v397 = vunpack.c.l.b16 %v238
      %v398 = vunpack.c.h.b16 %v238
      %v399 = vunpack.c.l.b16 %v239
      %v400 = vunpack.c.h.b16 %v239
      %v401 = vunpack.c.l.b16 %v240
      %v402 = vunpack.c.h.b16 %v240
      %v403 = vunpack.c.l.b16 %v241
      %v404 = vunpack.c.h.b16 %v241
      %v405 = vunpack.c.l.b16 %v242
      %v406 = vunpack.c.h.b16 %v242
      %v407 = vunpack.c.l.b16 %v243
      %v408 = vunpack.c.h.b16 %v243
      %v409 = vunpack.c.l.b16 %v244
      %v410 = vunpack.c.h.b16 %v244
      %v411 = vunpack.c.l.b16 %v245
      %v412 = vunpack.c.h.b16 %v245
      %v413 = vunpack.c.l.b16 %v246
      %v414 = vunpack.c.h.b16 %v246
      %v415 = vunpack.c.l.b16 %v247
      %v416 = vunpack.c.h.b16 %v247
      %v417 = vunpack.c.l.b16 %v248
      %v418 = vunpack.c.h.b16 %v248
      %v419 = vunpack.c.l.b16 %v249
      %v420 = vunpack.c.h.b16 %v249
      %v421 = vunpack.c.l.b16 %v250
      %v422 = vunpack.c.h.b16 %v250
      %v423 = vunpack.c.l.b16 %v251
      %v424 = vunpack.c.h.b16 %v251
      %v425 = vunpack.c.l.b16 %v252
      %v426 = vunpack.c.h.b16 %v252
      %v427 = vunpack.c.l.b16 %v253
      %v428 = vunpack.c.h.b16 %v253
      %v429 = vunpack.c.l.b16 %v254
      %v430 = vunpack.c.h.b16 %v254
      %v431 = vpack.c.b16 %v369, %v367
      %v432 = vpack.c.b16 %v370, %v368
      %v433 = vpack.c.b16 %v373, %v371
      %v434 = vpack.c.b16 %v374, %v372
      %v435 = vpack.c.b16 %v377, %v375
      %v436 = vpack.c.b16 %v378, %v376
      %v437 = vpack.c.b16 %v381, %v379
      %v438 = vpack.c.b16 %v382, %v380
      %v439 = vpack.c.b16 %v385, %v383
      %v440 = vpack.c.b16 %v386, %v384
      %v441 = vpack.c.b16 %v389, %v387
      %v442 = vpack.c.b16 %v390, %v388
      %v443 = vpack.c.b16 %v393, %v391
      %v444 = vpack.c.b16 %v394, %v392
      %v445 = vpack.c.b16 %v397, %v395
      %v446 = vpack.c.b16 %v398, %v396
      %v447 = vpack.c.b16 %v401, %v399
      %v448 = vpack.c.b16 %v402, %v400
      %v449 = vpack.c.b16 %v405, %v403
      %v450 = vpack.c.b16 %v406, %v404
      %v451 = vpack.c.b16 %v409, %v407
      %v452 = vpack.c.b16 %v410, %v408
      %v453 = vpack.c.b16 %v413, %v411
      %v454 = vpack.c.b16 %v414, %v412
      %v455 = vpack.c.b16 %v417, %v415
      %v456 = vpack.c.b16 %v418, %v416
      %v457 = vpack.c.b16 %v421, %v419
      %v458 = vpack.c.b16 %v422, %v420
      %v459 = vpack.c.b16 %v425, %v423
      %v460 = vpack.c.b16 %v426, %v424
      %v461 = vpack.c.b16 %v429, %v427
      %v462 = vpack.c.b16 %v430, %v428
      %495 = vmatpush.bf16.msra.mxu0 %v445
      %496 = vmatpush.bf16.msra.mxu0 %v443
      %497 = vmatpush.bf16.msra.mxu0 %v441
      %498 = vmatpush.bf16.msra.mxu0 %v439
      %499 = vmatpush.bf16.msra.mxu0 %v437
      %500 = vmatpush.bf16.msra.mxu0 %v435
      %501 = vmatpush.bf16.msra.mxu0 %v433
      %502 = vmatpush.bf16.msra.mxu0 %v431
      %503 = vmatmul.bf16.gmra.mxu0 %v303
      %v504 = vpop.f32.mrf.mxu0
      %v505 = vadd.f32 0.0, %v504
      %v506 = vpop.f32.mrf.mxu0
      %v507 = vadd.f32 0.0, %v506
      %508 = vmatmul.bf16.gmra.mxu0 %v305
      %v509 = vpop.f32.mrf.mxu0
      %v510 = vadd.f32 0.0, %v509
      %v511 = vpop.f32.mrf.mxu0
      %v512 = vadd.f32 0.0, %v511
      %513 = vmatmul.bf16.gmra.mxu0 %v307
      %v514 = vpop.f32.mrf.mxu0
      %v515 = vadd.f32 0.0, %v514
      %v516 = vpop.f32.mrf.mxu0
      %v517 = vadd.f32 0.0, %v516
      %518 = vmatmul.bf16.gmra.mxu0 %v309
      %v519 = vpop.f32.mrf.mxu0
      %v520 = vadd.f32 0.0, %v519
      %v521 = vpop.f32.mrf.mxu0
      %v522 = vadd.f32 0.0, %v521
      %523 = vmatmul.bf16.gmra.mxu0 %v311
      %v524 = vpop.f32.mrf.mxu0
      %v525 = vadd.f32 0.0, %v524
      %v526 = vpop.f32.mrf.mxu0
      %v527 = vadd.f32 0.0, %v526
      %528 = vmatmul.bf16.gmra.mxu0 %v313
      %v529 = vpop.f32.mrf.mxu0
      %v530 = vadd.f32 0.0, %v529
      %v531 = vpop.f32.mrf.mxu0
      %v532 = vadd.f32 0.0, %v531
      %533 = vmatmul.bf16.gmra.mxu0 %v315
      %v534 = vpop.f32.mrf.mxu0
      %v535 = vadd.f32 0.0, %v534
      %v536 = vpop.f32.mrf.mxu0
      %v537 = vadd.f32 0.0, %v536
      %538 = vmatmul.bf16.gmra.mxu0 %v317
      %v539 = vpop.f32.mrf.mxu0
      %v540 = vadd.f32 0.0, %v539
      %v541 = vpop.f32.mrf.mxu0
      %v542 = vadd.f32 0.0, %v541
      %543 = vdwg.mxu0
      %544 = vmatpush.bf16.msra.mxu0 %v461
      %545 = vmatpush.bf16.msra.mxu0 %v459
      %546 = vmatpush.bf16.msra.mxu0 %v457
      %547 = vmatpush.bf16.msra.mxu0 %v455
      %548 = vmatpush.bf16.msra.mxu0 %v453
      %549 = vmatpush.bf16.msra.mxu0 %v451
      %550 = vmatpush.bf16.msra.mxu0 %v449
      %551 = vmatpush.bf16.msra.mxu0 %v447
      %552 = vmatmul.bf16.gmra.mxu0 %v304
      %v553 = vpop.f32.mrf.mxu0
      %v554 = vadd.f32 %v505, %v553
      %v555 = vpop.f32.mrf.mxu0
      %v556 = vadd.f32 %v507, %v555
      %557 = vmatmul.bf16.gmra.mxu0 %v306
      %v558 = vpop.f32.mrf.mxu0
      %v559 = vadd.f32 %v510, %v558
      %v560 = vpop.f32.mrf.mxu0
      %v561 = vadd.f32 %v512, %v560
      %562 = vmatmul.bf16.gmra.mxu0 %v308
      %v563 = vpop.f32.mrf.mxu0
      %v564 = vadd.f32 %v515, %v563
      %v565 = vpop.f32.mrf.mxu0
      %v566 = vadd.f32 %v517, %v565
      %567 = vmatmul.bf16.gmra.mxu0 %v310
      %v568 = vpop.f32.mrf.mxu0
      %v569 = vadd.f32 %v520, %v568
      %v570 = vpop.f32.mrf.mxu0
      %v571 = vadd.f32 %v522, %v570
      %572 = vmatmul.bf16.gmra.mxu0 %v312
      %v573 = vpop.f32.mrf.mxu0
      %v574 = vadd.f32 %v525, %v573
      %v575 = vpop.f32.mrf.mxu0
      %v576 = vadd.f32 %v527, %v575
      %577 = vmatmul.bf16.gmra.mxu0 %v314
      %v578 = vpop.f32.mrf.mxu0
      %v579 = vadd.f32 %v530, %v578
      %v580 = vpop.f32.mrf.mxu0
      %v581 = vadd.f32 %v532, %v580
      %582 = vmatmul.bf16.gmra.mxu0 %v316
      %v583 = vpop.f32.mrf.mxu0
      %v584 = vadd.f32 %v535, %v583
      %v585 = vpop.f32.mrf.mxu0
      %v586 = vadd.f32 %v537, %v585
      %587 = vmatmul.bf16.gmra.mxu0 %v318
      %v588 = vpop.f32.mrf.mxu0
      %v589 = vadd.f32 %v540, %v588
      %v590 = vpop.f32.mrf.mxu0
      %v591 = vadd.f32 %v542, %v590
      %592 = vdwg.mxu0
      %593 = vmatpush.bf16.msra.mxu0 %v446
      %594 = vmatpush.bf16.msra.mxu0 %v444
      %595 = vmatpush.bf16.msra.mxu0 %v442
      %596 = vmatpush.bf16.msra.mxu0 %v440
      %597 = vmatpush.bf16.msra.mxu0 %v438
      %598 = vmatpush.bf16.msra.mxu0 %v436
      %599 = vmatpush.bf16.msra.mxu0 %v434
      %600 = vmatpush.bf16.msra.mxu0 %v432
      %601 = vmatmul.bf16.gmra.mxu0 %v303
      %v602 = vpop.f32.mrf.mxu0
      %v603 = vadd.f32 0.0, %v602
      %v604 = vpop.f32.mrf.mxu0
      %v605 = vadd.f32 0.0, %v604
      %606 = vmatmul.bf16.gmra.mxu0 %v305
      %v607 = vpop.f32.mrf.mxu0
      %v608 = vadd.f32 0.0, %v607
      %v609 = vpop.f32.mrf.mxu0
      %v610 = vadd.f32 0.0, %v609
      %611 = vmatmul.bf16.gmra.mxu0 %v307
      %v612 = vpop.f32.mrf.mxu0
      %v613 = vadd.f32 0.0, %v612
      %v614 = vpop.f32.mrf.mxu0
      %v615 = vadd.f32 0.0, %v614
      %616 = vmatmul.bf16.gmra.mxu0 %v309
      %v617 = vpop.f32.mrf.mxu0
      %v618 = vadd.f32 0.0, %v617
      %v619 = vpop.f32.mrf.mxu0
      %v620 = vadd.f32 0.0, %v619
      %621 = vmatmul.bf16.gmra.mxu0 %v311
      %v622 = vpop.f32.mrf.mxu0
      %v623 = vadd.f32 0.0, %v622
      %v624 = vpop.f32.mrf.mxu0
      %v625 = vadd.f32 0.0, %v624
      %626 = vmatmul.bf16.gmra.mxu0 %v313
      %v627 = vpop.f32.mrf.mxu0
      %v628 = vadd.f32 0.0, %v627
      %v629 = vpop.f32.mrf.mxu0
      %v630 = vadd.f32 0.0, %v629
      %631 = vmatmul.bf16.gmra.mxu0 %v315
      %v632 = vpop.f32.mrf.mxu0
      %v633 = vadd.f32 0.0, %v632
      %v634 = vpop.f32.mrf.mxu0
      %v635 = vadd.f32 0.0, %v634
      %636 = vmatmul.bf16.gmra.mxu0 %v317
      %v637 = vpop.f32.mrf.mxu0
      %v638 = vadd.f32 0.0, %v637
      %v639 = vpop.f32.mrf.mxu0
      %v640 = vadd.f32 0.0, %v639
      %641 = vdwg.mxu0
      %642 = vmatpush.bf16.msra.mxu0 %v462
      %643 = vmatpush.bf16.msra.mxu0 %v460
      %644 = vmatpush.bf16.msra.mxu0 %v458
      %645 = vmatpush.bf16.msra.mxu0 %v456
      %646 = vmatpush.bf16.msra.mxu0 %v454
      %647 = vmatpush.bf16.msra.mxu0 %v452
      %648 = vmatpush.bf16.msra.mxu0 %v450
      %649 = vmatpush.bf16.msra.mxu0 %v448
      %650 = vmatmul.bf16.gmra.mxu0 %v304
      %v651 = vpop.f32.mrf.mxu0
      %v652 = vadd.f32 %v603, %v651
      %v653 = vpop.f32.mrf.mxu0
      %v654 = vadd.f32 %v605, %v653
      %655 = vmatmul.bf16.gmra.mxu0 %v306
      %v656 = vpop.f32.mrf.mxu0
      %v657 = vadd.f32 %v608, %v656
      %v658 = vpop.f32.mrf.mxu0
      %v659 = vadd.f32 %v610, %v658
      %660 = vmatmul.bf16.gmra.mxu0 %v308
      %v661 = vpop.f32.mrf.mxu0
      %v662 = vadd.f32 %v613, %v661
      %v663 = vpop.f32.mrf.mxu0
      %v664 = vadd.f32 %v615, %v663
      %665 = vmatmul.bf16.gmra.mxu0 %v310
      %v666 = vpop.f32.mrf.mxu0
      %v667 = vadd.f32 %v618, %v666
      %v668 = vpop.f32.mrf.mxu0
      %v669 = vadd.f32 %v620, %v668
      %670 = vmatmul.bf16.gmra.mxu0 %v312
      %v671 = vpop.f32.mrf.mxu0
      %v672 = vadd.f32 %v623, %v671
      %v673 = vpop.f32.mrf.mxu0
      %v674 = vadd.f32 %v625, %v673
      %675 = vmatmul.bf16.gmra.mxu0 %v314
      %v676 = vpop.f32.mrf.mxu0
      %v677 = vadd.f32 %v628, %v676
      %v678 = vpop.f32.mrf.mxu0
      %v679 = vadd.f32 %v630, %v678
      %680 = vmatmul.bf16.gmra.mxu0 %v316
      %v681 = vpop.f32.mrf.mxu0
      %v682 = vadd.f32 %v633, %v681
      %v683 = vpop.f32.mrf.mxu0
      %v684 = vadd.f32 %v635, %v683
      %685 = vmatmul.bf16.gmra.mxu0 %v318
      %v686 = vpop.f32.mrf.mxu0
      %v687 = vadd.f32 %v638, %v686
      %v688 = vpop.f32.mrf.mxu0
      %v689 = vadd.f32 %v640, %v688
      %690 = vdwg.mxu0
      %v691 = vmax.f32 %v554, 0.0
      %v692 = vmax.f32 %v652, 0.0
      %v693 = vmax.f32 %v556, 0.0
      %v694 = vmax.f32 %v654, 0.0
      %v695 = vmax.f32 %v559, 0.0
      %v696 = vmax.f32 %v657, 0.0
      %v697 = vmax.f32 %v561, 0.0
      %v698 = vmax.f32 %v659, 0.0
      %v699 = vmax.f32 %v564, 0.0
      %v700 = vmax.f32 %v662, 0.0
      %v701 = vmax.f32 %v566, 0.0
      %v702 = vmax.f32 %v664, 0.0
      %v703 = vmax.f32 %v569, 0.0
      %v704 = vmax.f32 %v667, 0.0
      %v705 = vmax.f32 %v571, 0.0
      %v706 = vmax.f32 %v669, 0.0
      %v707 = vmax.f32 %v574, 0.0
      %v708 = vmax.f32 %v672, 0.0
      %v709 = vmax.f32 %v576, 0.0
      %v710 = vmax.f32 %v674, 0.0
      %v711 = vmax.f32 %v579, 0.0
      %v712 = vmax.f32 %v677, 0.0
      %v713 = vmax.f32 %v581, 0.0
      %v714 = vmax.f32 %v679, 0.0
      %v715 = vmax.f32 %v584, 0.0
      %v716 = vmax.f32 %v682, 0.0
      %v717 = vmax.f32 %v586, 0.0
      %v718 = vmax.f32 %v684, 0.0
      %v719 = vmax.f32 %v589, 0.0
      %v720 = vmax.f32 %v687, 0.0
      %v721 = vmax.f32 %v591, 0.0
      %v722 = vmax.f32 %v689, 0.0
      %v723 = vpack.c.bf16 %v693, %v691
      %v724 = vpack.c.bf16 %v694, %v692
      %v725 = vpack.c.bf16 %v697, %v695
      %v726 = vpack.c.bf16 %v698, %v696
      %v727 = vpack.c.bf16 %v701, %v699
      %v728 = vpack.c.bf16 %v702, %v700
      %v729 = vpack.c.bf16 %v705, %v703
      %v730 = vpack.c.bf16 %v706, %v704
      %v731 = vpack.c.bf16 %v709, %v707
      %v732 = vpack.c.bf16 %v710, %v708
      %v733 = vpack.c.bf16 %v713, %v711
      %v734 = vpack.c.bf16 %v714, %v712
      %v735 = vpack.c.bf16 %v717, %v715
      %v736 = vpack.c.bf16 %v718, %v716
      %v737 = vpack.c.bf16 %v721, %v719
      %v738 = vpack.c.bf16 %v722, %v720
      %v739 = vld [vmem:[%s2] sm:$0xff]
      %v740 = vld [vmem:[%s2 + $0x8] sm:$0xff]
      %v741 = vld [vmem:[%s2 + $0x10] sm:$0xff]
      %v742 = vld [vmem:[%s2 + $0x18] sm:$0xff]
      %v743 = vld [vmem:[%s2 + $0x20] sm:$0xff]
      %v744 = vld [vmem:[%s2 + $0x28] sm:$0xff]
      %v745 = vld [vmem:[%s2 + $0x30] sm:$0xff]
      %v746 = vld [vmem:[%s2 + $0x38] sm:$0xff]
      %v747 = vld [vmem:[%s2 + $0x40] sm:$0xff]
      %v748 = vld [vmem:[%s2 + $0x48] sm:$0xff]
      %v749 = vld [vmem:[%s2 + $0x50] sm:$0xff]
      %v750 = vld [vmem:[%s2 + $0x58] sm:$0xff]
      %v751 = vld [vmem:[%s2 + $0x60] sm:$0xff]
      %v752 = vld [vmem:[%s2 + $0x68] sm:$0xff]
      %v753 = vld [vmem:[%s2 + $0x70] sm:$0xff]
      %v754 = vld [vmem:[%s2 + $0x78] sm:$0xff]
      %v755 = vld [vmem:[%s2 + $0x80] sm:$0xff]
      %v756 = vld [vmem:[%s2 + $0x88] sm:$0xff]
      %v757 = vld [vmem:[%s2 + $0x90] sm:$0xff]
      %v758 = vld [vmem:[%s2 + $0x98] sm:$0xff]
      %v759 = vld [vmem:[%s2 + $0xa0] sm:$0xff]
      %v760 = vld [vmem:[%s2 + $0xa8] sm:$0xff]
      %v761 = vld [vmem:[%s2 + $0xb0] sm:$0xff]
      %v762 = vld [vmem:[%s2 + $0xb8] sm:$0xff]
      %v763 = vld [vmem:[%s2 + $0xc0] sm:$0xff]
      %v764 = vld [vmem:[%s2 + $0xc8] sm:$0xff]
      %v765 = vld [vmem:[%s2 + $0xd0] sm:$0xff]
      %v766 = vld [vmem:[%s2 + $0xd8] sm:$0xff]
      %v767 = vld [vmem:[%s2 + $0xe0] sm:$0xff]
      %v768 = vld [vmem:[%s2 + $0xe8] sm:$0xff]
      %v769 = vld [vmem:[%s2 + $0xf0] sm:$0xff]
      %v770 = vld [vmem:[%s2 + $0xf8] sm:$0xff]
      %v803 = vunpack.c.l.b16 %v739
      %v804 = vunpack.c.h.b16 %v739
      %v805 = vunpack.c.l.b16 %v740
      %v806 = vunpack.c.h.b16 %v740
      %v807 = vunpack.c.l.b16 %v741
      %v808 = vunpack.c.h.b16 %v741
      %v809 = vunpack.c.l.b16 %v742
      %v810 = vunpack.c.h.b16 %v742
      %v811 = vunpack.c.l.b16 %v743
      %v812 = vunpack.c.h.b16 %v743
      %v813 = vunpack.c.l.b16 %v744
      %v814 = vunpack.c.h.b16 %v744
      %v815 = vunpack.c.l.b16 %v745
      %v816 = vunpack.c.h.b16 %v745
      %v817 = vunpack.c.l.b16 %v746
      %v818 = vunpack.c.h.b16 %v746
      %v819 = vunpack.c.l.b16 %v747
      %v820 = vunpack.c.h.b16 %v747
      %v821 = vunpack.c.l.b16 %v748
      %v822 = vunpack.c.h.b16 %v748
      %v823 = vunpack.c.l.b16 %v749
      %v824 = vunpack.c.h.b16 %v749
      %v825 = vunpack.c.l.b16 %v750
      %v826 = vunpack.c.h.b16 %v750
      %v827 = vunpack.c.l.b16 %v751
      %v828 = vunpack.c.h.b16 %v751
      %v829 = vunpack.c.l.b16 %v752
      %v830 = vunpack.c.h.b16 %v752
      %v831 = vunpack.c.l.b16 %v753
      %v832 = vunpack.c.h.b16 %v753
      %v833 = vunpack.c.l.b16 %v754
      %v834 = vunpack.c.h.b16 %v754
      %v835 = vunpack.c.l.b16 %v755
      %v836 = vunpack.c.h.b16 %v755
      %v837 = vunpack.c.l.b16 %v756
      %v838 = vunpack.c.h.b16 %v756
      %v839 = vunpack.c.l.b16 %v757
      %v840 = vunpack.c.h.b16 %v757
      %v841 = vunpack.c.l.b16 %v758
      %v842 = vunpack.c.h.b16 %v758
      %v843 = vunpack.c.l.b16 %v759
      %v844 = vunpack.c.h.b16 %v759
      %v845 = vunpack.c.l.b16 %v760
      %v846 = vunpack.c.h.b16 %v760
      %v847 = vunpack.c.l.b16 %v761
      %v848 = vunpack.c.h.b16 %v761
      %v849 = vunpack.c.l.b16 %v762
      %v850 = vunpack.c.h.b16 %v762
      %v851 = vunpack.c.l.b16 %v763
      %v852 = vunpack.c.h.b16 %v763
      %v853 = vunpack.c.l.b16 %v764
      %v854 = vunpack.c.h.b16 %v764
      %v855 = vunpack.c.l.b16 %v765
      %v856 = vunpack.c.h.b16 %v765
      %v857 = vunpack.c.l.b16 %v766
      %v858 = vunpack.c.h.b16 %v766
      %v859 = vunpack.c.l.b16 %v767
      %v860 = vunpack.c.h.b16 %v767
      %v861 = vunpack.c.l.b16 %v768
      %v862 = vunpack.c.h.b16 %v768
      %v863 = vunpack.c.l.b16 %v769
      %v864 = vunpack.c.h.b16 %v769
      %v865 = vunpack.c.l.b16 %v770
      %v866 = vunpack.c.h.b16 %v770
      %v867 = vpack.c.b16 %v805, %v803
      %v868 = vpack.c.b16 %v806, %v804
      %v869 = vpack.c.b16 %v809, %v807
      %v870 = vpack.c.b16 %v810, %v808
      %v871 = vpack.c.b16 %v813, %v811
      %v872 = vpack.c.b16 %v814, %v812
      %v873 = vpack.c.b16 %v817, %v815
      %v874 = vpack.c.b16 %v818, %v816
      %v875 = vpack.c.b16 %v821, %v819
      %v876 = vpack.c.b16 %v822, %v820
      %v877 = vpack.c.b16 %v825, %v823
      %v878 = vpack.c.b16 %v826, %v824
      %v879 = vpack.c.b16 %v829, %v827
      %v880 = vpack.c.b16 %v830, %v828
      %v881 = vpack.c.b16 %v833, %v831
      %v882 = vpack.c.b16 %v834, %v832
      %v883 = vpack.c.b16 %v837, %v835
      %v884 = vpack.c.b16 %v838, %v836
      %v885 = vpack.c.b16 %v841, %v839
      %v886 = vpack.c.b16 %v842, %v840
      %v887 = vpack.c.b16 %v845, %v843
      %v888 = vpack.c.b16 %v846, %v844
      %v889 = vpack.c.b16 %v849, %v847
      %v890 = vpack.c.b16 %v850, %v848
      %v891 = vpack.c.b16 %v853, %v851
      %v892 = vpack.c.b16 %v854, %v852
      %v893 = vpack.c.b16 %v857, %v855
      %v894 = vpack.c.b16 %v858, %v856
      %v895 = vpack.c.b16 %v861, %v859
      %v896 = vpack.c.b16 %v862, %v860
      %v897 = vpack.c.b16 %v865, %v863
      %v898 = vpack.c.b16 %v866, %v864
      %931 = vmatpush.bf16.msra.mxu0 %v881
      %932 = vmatpush.bf16.msra.mxu0 %v879
      %933 = vmatpush.bf16.msra.mxu0 %v877
      %934 = vmatpush.bf16.msra.mxu0 %v875
      %935 = vmatpush.bf16.msra.mxu0 %v873
      %936 = vmatpush.bf16.msra.mxu0 %v871
      %937 = vmatpush.bf16.msra.mxu0 %v869
      %938 = vmatpush.bf16.msra.mxu0 %v867
      %939 = vmatmul.bf16.gmra.mxu0 %v723
      %v940 = vpop.f32.mrf.mxu0
      %v941 = vadd.f32 0.0, %v940
      %v942 = vpop.f32.mrf.mxu0
      %v943 = vadd.f32 0.0, %v942
      %944 = vmatmul.bf16.gmra.mxu0 %v725
      %v945 = vpop.f32.mrf.mxu0
      %v946 = vadd.f32 0.0, %v945
      %v947 = vpop.f32.mrf.mxu0
      %v948 = vadd.f32 0.0, %v947
      %949 = vmatmul.bf16.gmra.mxu0 %v727
      %v950 = vpop.f32.mrf.mxu0
      %v951 = vadd.f32 0.0, %v950
      %v952 = vpop.f32.mrf.mxu0
      %v953 = vadd.f32 0.0, %v952
      %954 = vmatmul.bf16.gmra.mxu0 %v729
      %v955 = vpop.f32.mrf.mxu0
      %v956 = vadd.f32 0.0, %v955
      %v957 = vpop.f32.mrf.mxu0
      %v958 = vadd.f32 0.0, %v957
      %959 = vmatmul.bf16.gmra.mxu0 %v731
      %v960 = vpop.f32.mrf.mxu0
      %v961 = vadd.f32 0.0, %v960
      %v962 = vpop.f32.mrf.mxu0
      %v963 = vadd.f32 0.0, %v962
      %964 = vmatmul.bf16.gmra.mxu0 %v733
      %v965 = vpop.f32.mrf.mxu0
      %v966 = vadd.f32 0.0, %v965
      %v967 = vpop.f32.mrf.mxu0
      %v968 = vadd.f32 0.0, %v967
      %969 = vmatmul.bf16.gmra.mxu0 %v735
      %v970 = vpop.f32.mrf.mxu0
      %v971 = vadd.f32 0.0, %v970
      %v972 = vpop.f32.mrf.mxu0
      %v973 = vadd.f32 0.0, %v972
      %974 = vmatmul.bf16.gmra.mxu0 %v737
      %v975 = vpop.f32.mrf.mxu0
      %v976 = vadd.f32 0.0, %v975
      %v977 = vpop.f32.mrf.mxu0
      %v978 = vadd.f32 0.0, %v977
      %979 = vdwg.mxu0
      %980 = vmatpush.bf16.msra.mxu0 %v897
      %981 = vmatpush.bf16.msra.mxu0 %v895
      %982 = vmatpush.bf16.msra.mxu0 %v893
      %983 = vmatpush.bf16.msra.mxu0 %v891
      %984 = vmatpush.bf16.msra.mxu0 %v889
      %985 = vmatpush.bf16.msra.mxu0 %v887
      %986 = vmatpush.bf16.msra.mxu0 %v885
      %987 = vmatpush.bf16.msra.mxu0 %v883
      %988 = vmatmul.bf16.gmra.mxu0 %v724
      %v989 = vpop.f32.mrf.mxu0
      %v990 = vadd.f32 %v941, %v989
      %v991 = vpop.f32.mrf.mxu0
      %v992 = vadd.f32 %v943, %v991
      %993 = vmatmul.bf16.gmra.mxu0 %v726
      %v994 = vpop.f32.mrf.mxu0
      %v995 = vadd.f32 %v946, %v994
      %v996 = vpop.f32.mrf.mxu0
      %v997 = vadd.f32 %v948, %v996
      %998 = vmatmul.bf16.gmra.mxu0 %v728
      %v999 = vpop.f32.mrf.mxu0
      %v1000 = vadd.f32 %v951, %v999
      %v1001 = vpop.f32.mrf.mxu0
      %v1002 = vadd.f32 %v953, %v1001
      %1003 = vmatmul.bf16.gmra.mxu0 %v730
      %v1004 = vpop.f32.mrf.mxu0
      %v1005 = vadd.f32 %v956, %v1004
      %v1006 = vpop.f32.mrf.mxu0
      %v1007 = vadd.f32 %v958, %v1006
      %1008 = vmatmul.bf16.gmra.mxu0 %v732
      %v1009 = vpop.f32.mrf.mxu0
      %v1010 = vadd.f32 %v961, %v1009
      %v1011 = vpop.f32.mrf.mxu0
      %v1012 = vadd.f32 %v963, %v1011
      %1013 = vmatmul.bf16.gmra.mxu0 %v734
      %v1014 = vpop.f32.mrf.mxu0
      %v1015 = vadd.f32 %v966, %v1014
      %v1016 = vpop.f32.mrf.mxu0
      %v1017 = vadd.f32 %v968, %v1016
      %1018 = vmatmul.bf16.gmra.mxu0 %v736
      %v1019 = vpop.f32.mrf.mxu0
      %v1020 = vadd.f32 %v971, %v1019
      %v1021 = vpop.f32.mrf.mxu0
      %v1022 = vadd.f32 %v973, %v1021
      %1023 = vmatmul.bf16.gmra.mxu0 %v738
      %v1024 = vpop.f32.mrf.mxu0
      %v1025 = vadd.f32 %v976, %v1024
      %v1026 = vpop.f32.mrf.mxu0
      %v1027 = vadd.f32 %v978, %v1026
      %1028 = vdwg.mxu0
      %1029 = vmatpush.bf16.msra.mxu0 %v882
      %1030 = vmatpush.bf16.msra.mxu0 %v880
      %1031 = vmatpush.bf16.msra.mxu0 %v878
      %1032 = vmatpush.bf16.msra.mxu0 %v876
      %1033 = vmatpush.bf16.msra.mxu0 %v874
      %1034 = vmatpush.bf16.msra.mxu0 %v872
      %1035 = vmatpush.bf16.msra.mxu0 %v870
      %1036 = vmatpush.bf16.msra.mxu0 %v868
      %1037 = vmatmul.bf16.gmra.mxu0 %v723
      %v1038 = vpop.f32.mrf.mxu0
      %v1039 = vadd.f32 0.0, %v1038
      %v1040 = vpop.f32.mrf.mxu0
      %v1041 = vadd.f32 0.0, %v1040
      %1042 = vmatmul.bf16.gmra.mxu0 %v725
      %v1043 = vpop.f32.mrf.mxu0
      %v1044 = vadd.f32 0.0, %v1043
      %v1045 = vpop.f32.mrf.mxu0
      %v1046 = vadd.f32 0.0, %v1045
      %1047 = vmatmul.bf16.gmra.mxu0 %v727
      %v1048 = vpop.f32.mrf.mxu0
      %v1049 = vadd.f32 0.0, %v1048
      %v1050 = vpop.f32.mrf.mxu0
      %v1051 = vadd.f32 0.0, %v1050
      %1052 = vmatmul.bf16.gmra.mxu0 %v729
      %v1053 = vpop.f32.mrf.mxu0
      %v1054 = vadd.f32 0.0, %v1053
      %v1055 = vpop.f32.mrf.mxu0
      %v1056 = vadd.f32 0.0, %v1055
      %1057 = vmatmul.bf16.gmra.mxu0 %v731
      %v1058 = vpop.f32.mrf.mxu0
      %v1059 = vadd.f32 0.0, %v1058
      %v1060 = vpop.f32.mrf.mxu0
      %v1061 = vadd.f32 0.0, %v1060
      %1062 = vmatmul.bf16.gmra.mxu0 %v733
      %v1063 = vpop.f32.mrf.mxu0
      %v1064 = vadd.f32 0.0, %v1063
      %v1065 = vpop.f32.mrf.mxu0
      %v1066 = vadd.f32 0.0, %v1065
      %1067 = vmatmul.bf16.gmra.mxu0 %v735
      %v1068 = vpop.f32.mrf.mxu0
      %v1069 = vadd.f32 0.0, %v1068
      %v1070 = vpop.f32.mrf.mxu0
      %v1071 = vadd.f32 0.0, %v1070
      %1072 = vmatmul.bf16.gmra.mxu0 %v737
      %v1073 = vpop.f32.mrf.mxu0
      %v1074 = vadd.f32 0.0, %v1073
      %v1075 = vpop.f32.mrf.mxu0
      %v1076 = vadd.f32 0.0, %v1075
      %1077 = vdwg.mxu0
      %1078 = vmatpush.bf16.msra.mxu0 %v898
      %1079 = vmatpush.bf16.msra.mxu0 %v896
      %1080 = vmatpush.bf16.msra.mxu0 %v894
      %1081 = vmatpush.bf16.msra.mxu0 %v892
      %1082 = vmatpush.bf16.msra.mxu0 %v890
      %1083 = vmatpush.bf16.msra.mxu0 %v888
      %1084 = vmatpush.bf16.msra.mxu0 %v886
      %1085 = vmatpush.bf16.msra.mxu0 %v884
      %1086 = vmatmul.bf16.gmra.mxu0 %v724
      %v1087 = vpop.f32.mrf.mxu0
      %v1088 = vadd.f32 %v1039, %v1087
      %v1089 = vpop.f32.mrf.mxu0
      %v1090 = vadd.f32 %v1041, %v1089
      %1091 = vmatmul.bf16.gmra.mxu0 %v726
      %v1092 = vpop.f32.mrf.mxu0
      %v1093 = vadd.f32 %v1044, %v1092
      %v1094 = vpop.f32.mrf.mxu0
      %v1095 = vadd.f32 %v1046, %v1094
      %1096 = vmatmul.bf16.gmra.mxu0 %v728
      %v1097 = vpop.f32.mrf.mxu0
      %v1098 = vadd.f32 %v1049, %v1097
      %v1099 = vpop.f32.mrf.mxu0
      %v1100 = vadd.f32 %v1051, %v1099
      %1101 = vmatmul.bf16.gmra.mxu0 %v730
      %v1102 = vpop.f32.mrf.mxu0
      %v1103 = vadd.f32 %v1054, %v1102
      %v1104 = vpop.f32.mrf.mxu0
      %v1105 = vadd.f32 %v1056, %v1104
      %1106 = vmatmul.bf16.gmra.mxu0 %v732
      %v1107 = vpop.f32.mrf.mxu0
      %v1108 = vadd.f32 %v1059, %v1107
      %v1109 = vpop.f32.mrf.mxu0
      %v1110 = vadd.f32 %v1061, %v1109
      %1111 = vmatmul.bf16.gmra.mxu0 %v734
      %v1112 = vpop.f32.mrf.mxu0
      %v1113 = vadd.f32 %v1064, %v1112
      %v1114 = vpop.f32.mrf.mxu0
      %v1115 = vadd.f32 %v1066, %v1114
      %1116 = vmatmul.bf16.gmra.mxu0 %v736
      %v1117 = vpop.f32.mrf.mxu0
      %v1118 = vadd.f32 %v1069, %v1117
      %v1119 = vpop.f32.mrf.mxu0
      %v1120 = vadd.f32 %v1071, %v1119
      %1121 = vmatmul.bf16.gmra.mxu0 %v738
      %v1122 = vpop.f32.mrf.mxu0
      %v1123 = vadd.f32 %v1074, %v1122
      %v1124 = vpop.f32.mrf.mxu0
      %v1125 = vadd.f32 %v1076, %v1124
      %1126 = vdwg.mxu0
      %v1127 = vpack.c.bf16 %v1088, %v990
      %v1128 = vpack.c.bf16 %v1090, %v992
      %v1129 = vpack.c.bf16 %v1093, %v995
      %v1130 = vpack.c.bf16 %v1095, %v997
      %v1131 = vpack.c.bf16 %v1098, %v1000
      %v1132 = vpack.c.bf16 %v1100, %v1002
      %v1133 = vpack.c.bf16 %v1103, %v1005
      %v1134 = vpack.c.bf16 %v1105, %v1007
      %v1135 = vpack.c.bf16 %v1108, %v1010
      %v1136 = vpack.c.bf16 %v1110, %v1012
      %v1137 = vpack.c.bf16 %v1113, %v1015
      %v1138 = vpack.c.bf16 %v1115, %v1017
      %v1139 = vpack.c.bf16 %v1118, %v1020
      %v1140 = vpack.c.bf16 %v1120, %v1022
      %v1141 = vpack.c.bf16 %v1123, %v1025
      %v1142 = vpack.c.bf16 %v1125, %v1027
      %1143 = vst [vmem:[%s205] sm:$0xff] %v1127
      %1144 = vst [vmem:[%s205 + $0x8] sm:$0xff] %v1128
      %1145 = vst [vmem:[%s205 + $0x10] sm:$0xff] %v1129
      %1146 = vst [vmem:[%s205 + $0x18] sm:$0xff] %v1130
      %1147 = vst [vmem:[%s205 + $0x20] sm:$0xff] %v1131
      %1148 = vst [vmem:[%s205 + $0x28] sm:$0xff] %v1132
      %1149 = vst [vmem:[%s205 + $0x30] sm:$0xff] %v1133
      %1150 = vst [vmem:[%s205 + $0x38] sm:$0xff] %v1134
      %1151 = vst [vmem:[%s205 + $0x40] sm:$0xff] %v1135
      %1152 = vst [vmem:[%s205 + $0x48] sm:$0xff] %v1136
      %1153 = vst [vmem:[%s205 + $0x50] sm:$0xff] %v1137
      %1154 = vst [vmem:[%s205 + $0x58] sm:$0xff] %v1138
      %1155 = vst [vmem:[%s205 + $0x60] sm:$0xff] %v1139
      %1156 = vst [vmem:[%s205 + $0x68] sm:$0xff] %v1140
      %1157 = vst [vmem:[%s205 + $0x70] sm:$0xff] %v1141
      %1158 = vst [vmem:[%s205 + $0x78] sm:$0xff] %v1142
      %s1159 = smul.u32 16, %s18
      %p1160 = scmp.lt.s32.totalorder %s1159, 31
      %s1161 = scalar_select %p1160, %s1159, 31
      %s1162 = smul.addr %s1161, 2
      %s1163 = smul.addr %s1162, 4
      %s1164 = scalar_lea.vmem %s3, %s1163
      // Predicated region
      $region33: #{batch_vgae_forward.4} parent=31 // pred_check
        %p1165 = pneg %p114
      $region34: #{batch_vgae_forward.4} parent=31 // pred_check_branch
        %1167 = sbr.rel (%p1165) target = $region36
      $region35: #{batch_vgae_forward.4} parent=31 // pred_region
        %s1168 = smul.u32 16, %s18
      $region36: #{batch_vgae_forward.4} parent=31 // pred_fallthru
        _
    $region32: #{batch_vgae_forward.4} parent=5 // pred_fallthru
      _
    %p1169 = scmp.le.s32.totalorder 2, %s9
    // Predicated region
    $region37: #{batch_vgae_forward.4} parent=5 // pred_check
      %p1170 = pneg %p1169
    $region38: #{batch_vgae_forward.4} parent=5 // pred_check_branch
      %1172 = sbr.rel (%p1170) target = $region40
    $region39: #{batch_vgae_forward.4} parent=5 // pred_region
      %s1173 = ssub.s32 %s9, 2
      // Predicated region
      $region41: #{batch_vgae_forward.4} parent=39 // pred_check
        %p1174 = pneg %p120
      $region42: #{batch_vgae_forward.4} parent=39 // pred_check_branch
        %1176 = sbr.rel (%p1174) target = $region44
      $region43: #{batch_vgae_forward.4} parent=39 // pred_region
        %s1177 = smul.u32 16, %s20
        %p1178 = scmp.lt.s32.totalorder %s1177, 31
        %s1179 = scalar_select %p1178, %s1177, 31
        %s1180 = smul.addr %s1179, 2
        %s1181 = smul.addr %s1180, 4
        %s1182 = scalar_lea.vmem %s3, %s1181
      $region44: #{batch_vgae_forward.4} parent=39 // pred_fallthru
        _
    $region40: #{batch_vgae_forward.4} parent=5 // pred_fallthru
      _
  $region6: #{batch_vgae_forward.4} parent=0 // loop_footer
    %s13 = sadd.s32 1, %s9
  $region7: #{batch_vgae_forward.4} parent=0 // loop_footer_branch
    %8 = sbr.rel target = $region3
  $region8: #{batch_vgae_forward.4} parent=0 // loop_exit
    _

</llo_original>
